<compile_context>
chip_gen: v7x
topology: tpu7x:2x2x1
jax: 0.10.0
libtpu: 0.0.40
codegen_flags: <defaults>
</compile_context>

<pallas_src>
import math

import jax
import jax.numpy as jnp
from jax import lax
from jax.experimental import pallas as pl
from jax.experimental.pallas import tpu as pltpu


_SELU_ALPHA = 1.6732632423543772
_SELU_SCALE = 1.0507009873554805
# Hard-coded 512, faithful to the PyTorch reference (even when hidden != 512).
_SCORE_SCALE = 1.0 / math.sqrt(512.0)


def _selu(x):
    # f32 elementwise path (v5e has no bf16 VPU/EUP).
    return _SELU_SCALE * jnp.where(x > 0, x, _SELU_ALPHA * (jnp.exp(x) - 1.0))


def _selfatt_body(ctx_ref,
                  w_e1_ref, b_e1_ref, w_e2_ref, b_e2_ref,
                  w_o1a_ref, w_o1b_ref, b_o1_ref, w_o2_ref, b_o2_ref,
                  out_ref, attn_ref, gamma_ref, *, tq, use_bf16_exp):
    q = pl.program_id(1)

    # --- once per batch: gamma_enc = linear_enc(context) -> persistent bf16 scratch ---
    @pl.when(q == 0)
    def _():
        ctx_bf = ctx_ref[...].astype(jnp.bfloat16)                       # (S, H)
        g = _selu(jnp.dot(ctx_bf, w_e1_ref[...],
                          preferred_element_type=jnp.float32) + b_e1_ref[...])
        gamma = _selu(jnp.dot(g.astype(jnp.bfloat16), w_e2_ref[...],
                              preferred_element_type=jnp.float32) + b_e2_ref[...])
        gamma_ref[...] = gamma.astype(jnp.bfloat16)

    row0 = pl.multiple_of(q * tq, tq)
    gamma_all = gamma_ref[...]                                           # (S, H)  bf16
    gamma_q = gamma_ref[pl.ds(row0, tq), :]                              # (Tq, H) bf16

    # scores = (gamma_q * 1/sqrt(512)) @ gamma_all^T : scale folded into the
    # small operand (Tq*H muls, not Tq*S); contraction of last dims avoids an
    # explicit XLU transpose.
    gq_scaled = (gamma_q.astype(jnp.float32) * _SCORE_SCALE).astype(jnp.bfloat16)
    scores = lax.dot_general(gq_scaled, gamma_all, (((1,), (1,)), ((), ())),
                             preferred_element_type=jnp.float32)         # (Tq, S)
    scores = scores - jnp.max(scores, axis=-1, keepdims=True)
    if use_bf16_exp:
        # v6e/v7x: bf16 EUP roughly doubles exp throughput; row-sum stays f32.
        e = jnp.exp(scores.astype(jnp.bfloat16)).astype(jnp.float32)
    else:
        e = jnp.exp(scores)
    attn = e * pl.reciprocal(jnp.sum(e, axis=-1, keepdims=True), approx=True)
    attn_bf = attn.astype(jnp.bfloat16)

    # c_t = weights @ gamma_enc
    c_t = jnp.dot(attn_bf, gamma_all, preferred_element_type=jnp.float32)  # (Tq, H)

    # linear_out on cat([gamma_enc, c_t], -1): the (2H -> H) weight is split
    # into two H x H halves so no concatenation is materialized.
    o1 = _selu(jnp.dot(gamma_q, w_o1a_ref[...],
                       preferred_element_type=jnp.float32)
               + jnp.dot(c_t.astype(jnp.bfloat16), w_o1b_ref[...],
                         preferred_element_type=jnp.float32)
               + b_o1_ref[...])
    o2 = _selu(jnp.dot(o1.astype(jnp.bfloat16), w_o2_ref[...],
                       preferred_element_type=jnp.float32) + b_o2_ref[...])

    out_ref[...] = o2 + ctx_ref[pl.ds(row0, tq), :]     # residual, direct write
    if attn_ref is not None:
        attn_ref[...] = attn_bf                          # bf16 weights writeback


def _make_kernel(return_weights, tq, use_bf16_exp):
    if return_weights:
        def kernel(ctx, w_e1, b_e1, w_e2, b_e2, w_o1a, w_o1b, b_o1, w_o2, b_o2,
                   out_ref, attn_ref, gamma_ref):
            _selfatt_body(ctx, w_e1, b_e1, w_e2, b_e2, w_o1a, w_o1b, b_o1,
                          w_o2, b_o2, out_ref, attn_ref, gamma_ref,
                          tq=tq, use_bf16_exp=use_bf16_exp)
    else:
        def kernel(ctx, w_e1, b_e1, w_e2, b_e2, w_o1a, w_o1b, b_o1, w_o2, b_o2,
                   out_ref, gamma_ref):
            _selfatt_body(ctx, w_e1, b_e1, w_e2, b_e2, w_o1a, w_o1b, b_o1,
                          w_o2, b_o2, out_ref, None, gamma_ref,
                          tq=tq, use_bf16_exp=use_bf16_exp)
    return kernel


def _pick_q_tile(S, target=256):
    """Largest divisor of S that is <= target (whole-S when S is small)."""
    if S <= target:
        return S
    for t in range(target, 7, -1):
        if S % t == 0:
            return t
    # TODO(synk): ragged last q-tile (pad/mask) for awkward S; un-tiled fallback.
    return S


def _vmem_limit_bytes():
    """Per-generation VMEM budget: ~100 MiB on 128-MiB parts, ~0.8x cap on v7x."""
    try:
        cap = int(pltpu.get_tpu_info().vmem_capacity_bytes)
    except Exception:
        cap = 128 * 1024 * 1024
    return min(100 * 1024 * 1024, int(cap * 0.8))


def _bf16_exp_supported():
    """bf16 EUP exists on v6e/v7x; keep f32 exp on v5e and older."""
    try:
        kind = jax.devices()[0].device_kind.lower()
    except Exception:
        return False
    return any(tag in kind for tag in ("v6", "v7", "7x"))


def luong_gate_attention_selfatt(context, params, *, return_weights=True,
                                 q_tile_target=256):
    """selfatt=True branch of the PyTorch module (eval mode).

    Returns (output, weights) with output: (S, B, H) (after .transpose(0, 1))
    and weights: (B, S, S) in bfloat16; or just output when return_weights=False.
    """
    B, S, H = context.shape
    tq = _pick_q_tile(S, q_tile_target)
    n_q = S // tq
    use_bf16_exp = _bf16_exp_supported()

    # Weights pre-cast to bf16 (MXU native); biases stay f32 (added post-acc).
    wdt = jnp.bfloat16
    flat_args = (
        params["w_e1_t"].astype(wdt), params["b_e1"],
        params["w_e2_t"].astype(wdt), params["b_e2"],
        params["w_o1a_t"].astype(wdt), params["w_o1b_t"].astype(wdt),
        params["b_o1"],
        params["w_o2_t"].astype(wdt), params["b_o2"],
    )

    # Grid-invariant operands: whole-array VMEM residents (no double buffering).
    resident = pl.BlockSpec(memory_space=pltpu.MemorySpace.VMEM)
    in_specs = [
        # Full (S, H) context per batch; block index constant over the q axis,
        # so it is DMA'd once per batch and stays resident across q-tiles.
        pl.BlockSpec((pl.Squeezed(), S, H), lambda b, q: (b, 0, 0)),
    ] + [resident] * 9

    out_spec_main = pl.BlockSpec((pl.Squeezed(), tq, H), lambda b, q: (b, q, 0))
    if return_weights:
        out_shape = (
            jax.ShapeDtypeStruct((B, S, H), jnp.float32),
            jax.ShapeDtypeStruct((B, S, S), jnp.bfloat16),
        )
        out_specs = [out_spec_main,
                     pl.BlockSpec((pl.Squeezed(), tq, S), lambda b, q: (b, q, 0))]
    else:
        out_shape = jax.ShapeDtypeStruct((B, S, H), jnp.float32)
        out_specs = out_spec_main

    kernel = _make_kernel(return_weights, tq, use_bf16_exp)

    result = pl.pallas_call(
        kernel,
        out_shape=out_shape,
        grid_spec=pltpu.PrefetchScalarGridSpec(
            num_scalar_prefetch=0,
            grid=(B, n_q),
            in_specs=in_specs,
            out_specs=out_specs,
            # gamma_enc for the current batch, persistent across q-tiles.
            scratch_shapes=[pltpu.VMEM((S, H), jnp.bfloat16)],
        ),
        compiler_params=pltpu.CompilerParams(
            # Batch axis parallel (megacore); q axis carries the gamma scratch
            # so it must stay sequential ("arbitrary").  On v7x keep B >= 2 so
            # both TensorCores get work.
            dimension_semantics=("parallel", "arbitrary"),
            vmem_limit_bytes=_vmem_limit_bytes(),
        ),
    )(context, *flat_args)

    if return_weights:
        out, attn = result
        # PyTorch: output = output.transpose(0, 1)
        return jnp.transpose(out, (1, 0, 2)), attn
    return jnp.transpose(result, (1, 0, 2))


def _init_linear(key, fan_in, fan_out):
    """PyTorch nn.Linear default init: U(-1/sqrt(fan_in), 1/sqrt(fan_in))."""
    k_w, k_b = jax.random.split(key)
    bound = 1.0 / math.sqrt(fan_in)
    w = jax.random.uniform(k_w, (fan_out, fan_in), jnp.float32, -bound, bound)
    b = jax.random.uniform(k_b, (fan_out,), jnp.float32, -bound, bound)
    return w, b


def make_params(key, hidden):
    keys = jax.random.split(key, 6)
    w_e1, b_e1 = _init_linear(keys[0], hidden, hidden)
    w_e2, b_e2 = _init_linear(keys[1], hidden, hidden)
    w_o1, b_o1 = _init_linear(keys[2], 2 * hidden, hidden)
    w_o2, b_o2 = _init_linear(keys[3], hidden, hidden)
    w_o1_t = w_o1.T  # (2H, H)
    return {
        # kernel-side (pre-transposed so the kernel computes x @ W_t + b)
        "w_e1_t": w_e1.T, "b_e1": b_e1.reshape(1, hidden),
        "w_e2_t": w_e2.T, "b_e2": b_e2.reshape(1, hidden),
        "w_o1a_t": w_o1_t[:hidden], "w_o1b_t": w_o1_t[hidden:],
        "b_o1": b_o1.reshape(1, hidden),
        "w_o2_t": w_o2.T, "b_o2": b_o2.reshape(1, hidden),
        # full matrix for the plain-JAX reference
        "w_o1_t_full": w_o1_t,
    }


def reference_forward(context, p):
    """Plain-JAX f32 reference of the PyTorch selfatt=True branch (eval mode)."""
    gamma = _selu(_selu(context @ p["w_e1_t"] + p["b_e1"]) @ p["w_e2_t"] + p["b_e2"])
    scores = jnp.einsum("bsh,bth->bst", gamma, gamma) / math.sqrt(512.0)
    attn = jax.nn.softmax(scores, axis=-1)
    c_t = jnp.einsum("bst,bth->bsh", attn, gamma)
    cat = jnp.concatenate([gamma, c_t], axis=-1)
    out = _selu(_selu(cat @ p["w_o1_t_full"] + p["b_o1"]) @ p["w_o2_t"] + p["b_o2"])
    out = out + context
    return jnp.transpose(out, (1, 0, 2)), attn


if __name__ == "__main__":
    # NOTE: small demo shapes per instructions; production shapes should keep
    # H (and ideally S) multiples of 128 lanes (256 contraction on v6e/v7x)
    # for unmasked stores / full MXU tiles.
    batch, seq, hidden = 2, 8, 32

    key = jax.random.PRNGKey(0)
    k_ctx, k_par = jax.random.split(key)
    context = jax.random.normal(k_ctx, (batch, seq, hidden), jnp.float32)
    params = make_params(k_par, hidden)

    out, weights = luong_gate_attention_selfatt(context, params,
                                                return_weights=True)
    out_only = luong_gate_attention_selfatt(context, params,
                                            return_weights=False)
    out = jax.block_until_ready(out)
    weights = jax.block_until_ready(weights)
    out_only = jax.block_until_ready(out_only)

    ref_out, ref_w = reference_forward(context, params)

    assert out.shape == (seq, batch, hidden), out.shape
    assert weights.shape == (batch, seq, seq), weights.shape
    assert weights.dtype == jnp.bfloat16, weights.dtype
    assert out_only.shape == (seq, batch, hidden), out_only.shape
    # Kernel matmuls run in bf16 (f32 accumulate) and the weights output is
    # bf16, vs the f32 reference, so tolerances are loosened accordingly.
    assert jnp.allclose(out, ref_out, rtol=2e-2, atol=2e-2)
    assert jnp.allclose(weights.astype(jnp.float32), ref_w, rtol=2e-2, atol=2e-2)
    assert jnp.allclose(out_only, ref_out, rtol=2e-2, atol=2e-2)

    print("KERNEL_OK")
</pallas_src>

<mosaic_0001>
module attributes {stable_mosaic.version = 11 : i64} {
  func.func @kernel(%arg0: i32, %arg1: i32, %arg2: memref<1x8x32xf32, #tpu.memory_space<vmem>>, %arg3: memref<32x32xbf16, #tpu.memory_space<vmem>>, %arg4: memref<1x32xf32, #tpu.memory_space<vmem>>, %arg5: memref<32x32xbf16, #tpu.memory_space<vmem>>, %arg6: memref<1x32xf32, #tpu.memory_space<vmem>>, %arg7: memref<32x32xbf16, #tpu.memory_space<vmem>>, %arg8: memref<32x32xbf16, #tpu.memory_space<vmem>>, %arg9: memref<1x32xf32, #tpu.memory_space<vmem>>, %arg10: memref<32x32xbf16, #tpu.memory_space<vmem>>, %arg11: memref<1x32xf32, #tpu.memory_space<vmem>>, %arg12: memref<1x8x32xf32, #tpu.memory_space<vmem>>, %arg13: memref<1x8x8xbf16, #tpu.memory_space<vmem>>, %arg14: memref<8x32xbf16, #tpu.memory_space<vmem>>) attributes {dimension_semantics = [#tpu.dimension_semantics<parallel>, #tpu.dimension_semantics<arbitrary>], iteration_bounds = array<i64: 2, 1>, scalar_prefetch = 0 : i64, scratch_operands = 1 : i64, tpu.core_type = #tpu.core_type<tc>, window_params = [{transform_indices = @transform_0, window_bounds = array<i64: 1, 8, 32>}, {pipeline_mode = #tpu.pipeline_mode<synchronous>, transform_indices = @transform_1, window_bounds = array<i64: 32, 32>}, {pipeline_mode = #tpu.pipeline_mode<synchronous>, transform_indices = @transform_2, window_bounds = array<i64: 1, 32>}, {pipeline_mode = #tpu.pipeline_mode<synchronous>, transform_indices = @transform_3, window_bounds = array<i64: 32, 32>}, {pipeline_mode = #tpu.pipeline_mode<synchronous>, transform_indices = @transform_4, window_bounds = array<i64: 1, 32>}, {pipeline_mode = #tpu.pipeline_mode<synchronous>, transform_indices = @transform_5, window_bounds = array<i64: 32, 32>}, {pipeline_mode = #tpu.pipeline_mode<synchronous>, transform_indices = @transform_6, window_bounds = array<i64: 32, 32>}, {pipeline_mode = #tpu.pipeline_mode<synchronous>, transform_indices = @transform_7, window_bounds = array<i64: 1, 32>}, {pipeline_mode = #tpu.pipeline_mode<synchronous>, transform_indices = @transform_8, window_bounds = array<i64: 32, 32>}, {pipeline_mode = #tpu.pipeline_mode<synchronous>, transform_indices = @transform_9, window_bounds = array<i64: 1, 32>}, {transform_indices = @transform_10, window_bounds = array<i64: 1, 8, 32>}, {transform_indices = @transform_11, window_bounds = array<i64: 1, 8, 8>}]} {
    %c0_i32 = arith.constant 0 : i32
    %0 = arith.cmpi eq, %arg1, %c0_i32 : i32
    %1 = arith.extui %0 : i1 to i32
    %c0_i32_0 = arith.constant 0 : i32
    %2 = arith.cmpi ne, %1, %c0_i32_0 : i32
    scf.if %2 {
      %c0_36 = arith.constant 0 : index
      %c0_37 = arith.constant 0 : index
      %c0_38 = arith.constant 0 : index
      %70 = vector.load %arg2[%c0_36, %c0_37, %c0_38] : memref<1x8x32xf32, #tpu.memory_space<vmem>>, vector<1x8x32xf32>
      %71 = vector.shape_cast %70 : vector<1x8x32xf32> to vector<8x32xf32>
      %72 = arith.truncf %71 : vector<8x32xf32> to vector<8x32xbf16>
      %c0_39 = arith.constant 0 : index
      %c0_40 = arith.constant 0 : index
      %73 = vector.load %arg3[%c0_39, %c0_40] : memref<32x32xbf16, #tpu.memory_space<vmem>>, vector<32x32xbf16>
      %cst_41 = arith.constant dense<0.000000e+00> : vector<8x32xf32>
      %74 = tpu.matmul %72, %73, %cst_41 {dimension_numbers = #tpu.dot_dimension_numbers<[1], [0], [0], [1], [0, 0, 1, 1], [], []>} : vector<8x32xbf16>, vector<32x32xbf16>, vector<8x32xf32> -> vector<8x32xf32>
      %c0_42 = arith.constant 0 : index
      %c0_43 = arith.constant 0 : index
      %75 = vector.load %arg4[%c0_42, %c0_43] : memref<1x32xf32, #tpu.memory_space<vmem>>, vector<1x32xf32>
      %76 = vector.broadcast %75 : vector<1x32xf32> to vector<8x32xf32>
      %77 = arith.addf %74, %76 : vector<8x32xf32>
      %cst_44 = arith.constant 0.000000e+00 : f32
      %78 = vector.broadcast %cst_44 : f32 to vector<8x32xf32>
      %79 = arith.cmpf ogt, %77, %78 : vector<8x32xf32>
      %80 = math.exp %77 : vector<8x32xf32>
      %cst_45 = arith.constant 1.000000e+00 : f32
      %81 = vector.broadcast %cst_45 : f32 to vector<8x32xf32>
      %82 = arith.subf %80, %81 : vector<8x32xf32>
      %cst_46 = arith.constant 1.67326319 : f32
      %83 = vector.broadcast %cst_46 : f32 to vector<8x32xf32>
      %84 = arith.mulf %83, %82 : vector<8x32xf32>
      %85 = arith.select %79, %77, %84 : vector<8x32xi1>, vector<8x32xf32>
      %cst_47 = arith.constant 1.05070102 : f32
      %86 = vector.broadcast %cst_47 : f32 to vector<8x32xf32>
      %87 = arith.mulf %86, %85 : vector<8x32xf32>
      %88 = arith.truncf %87 : vector<8x32xf32> to vector<8x32xbf16>
      %c0_48 = arith.constant 0 : index
      %c0_49 = arith.constant 0 : index
      %89 = vector.load %arg5[%c0_48, %c0_49] : memref<32x32xbf16, #tpu.memory_space<vmem>>, vector<32x32xbf16>
      %cst_50 = arith.constant dense<0.000000e+00> : vector<8x32xf32>
      %90 = tpu.matmul %88, %89, %cst_50 {dimension_numbers = #tpu.dot_dimension_numbers<[1], [0], [0], [1], [0, 0, 1, 1], [], []>} : vector<8x32xbf16>, vector<32x32xbf16>, vector<8x32xf32> -> vector<8x32xf32>
      %c0_51 = arith.constant 0 : index
      %c0_52 = arith.constant 0 : index
      %91 = vector.load %arg6[%c0_51, %c0_52] : memref<1x32xf32, #tpu.memory_space<vmem>>, vector<1x32xf32>
      %92 = vector.broadcast %91 : vector<1x32xf32> to vector<8x32xf32>
      %93 = arith.addf %90, %92 : vector<8x32xf32>
      %cst_53 = arith.constant 0.000000e+00 : f32
      %94 = vector.broadcast %cst_53 : f32 to vector<8x32xf32>
      %95 = arith.cmpf ogt, %93, %94 : vector<8x32xf32>
      %96 = math.exp %93 : vector<8x32xf32>
      %cst_54 = arith.constant 1.000000e+00 : f32
      %97 = vector.broadcast %cst_54 : f32 to vector<8x32xf32>
      %98 = arith.subf %96, %97 : vector<8x32xf32>
      %cst_55 = arith.constant 1.67326319 : f32
      %99 = vector.broadcast %cst_55 : f32 to vector<8x32xf32>
      %100 = arith.mulf %99, %98 : vector<8x32xf32>
      %101 = arith.select %95, %93, %100 : vector<8x32xi1>, vector<8x32xf32>
      %cst_56 = arith.constant 1.05070102 : f32
      %102 = vector.broadcast %cst_56 : f32 to vector<8x32xf32>
      %103 = arith.mulf %102, %101 : vector<8x32xf32>
      %104 = arith.truncf %103 : vector<8x32xf32> to vector<8x32xbf16>
      %c0_57 = arith.constant 0 : index
      %c0_58 = arith.constant 0 : index
      %105 = vector.load %arg14[%c0_57, %c0_58] : memref<8x32xbf16, #tpu.memory_space<vmem>>, vector<8x32xbf16>
      tpu.vector_store %arg14[%c0_57, %c0_58], %104 {strides = array<i32>} : memref<8x32xbf16, #tpu.memory_space<vmem>>, vector<8x32xbf16>,
    } else {
    }
    %c8_i32 = arith.constant 8 : i32
    %3 = arith.muli %arg1, %c8_i32 : i32
    %4 = tpu.assume_multiple %3, 8 : i32
    %c0 = arith.constant 0 : index
    %c0_1 = arith.constant 0 : index
    %5 = vector.load %arg14[%c0, %c0_1] : memref<8x32xbf16, #tpu.memory_space<vmem>>, vector<8x32xbf16>
    %6 = arith.index_cast %4 : i32 to index
    %c0_2 = arith.constant 0 : index
    %7 = vector.load %arg14[%6, %c0_2] : memref<8x32xbf16, #tpu.memory_space<vmem>>, vector<8x32xbf16>
    %8 = arith.extf %7 : vector<8x32xbf16> to vector<8x32xf32>
    %cst = arith.constant 0.0441941731 : f32
    %9 = vector.broadcast %cst : f32 to vector<8x32xf32>
    %10 = arith.mulf %8, %9 : vector<8x32xf32>
    %11 = arith.truncf %10 : vector<8x32xf32> to vector<8x32xbf16>
    %cst_3 = arith.constant dense<0.000000e+00> : vector<8x8xf32>
    %12 = tpu.matmul %11, %5, %cst_3 {dimension_numbers = #tpu.dot_dimension_numbers<[1], [1], [0], [0], [0, 0, 1, 0], [], []>} : vector<8x32xbf16>, vector<8x32xbf16>, vector<8x8xf32> -> vector<8x8xf32>
    %cst_4 = arith.constant dense<0xFF800000> : vector<8xf32>
    %13 = vector.multi_reduction <maximumf>, %12, %cst_4 [1] : vector<8x8xf32> to vector<8xf32>
    %14 = vector.shape_cast %13 : vector<8xf32> to vector<8x1xf32>
    %15 = vector.broadcast %14 : vector<8x1xf32> to vector<8x8xf32>
    %16 = arith.subf %12, %15 : vector<8x8xf32>
    %17 = math.exp %16 : vector<8x8xf32>
    %cst_5 = arith.constant dense<0.000000e+00> : vector<8xf32>
    %18 = vector.multi_reduction <add>, %17, %cst_5 [1] : vector<8x8xf32> to vector<8xf32>
    %19 = vector.shape_cast %18 : vector<8xf32> to vector<8x1xf32>
    %20 = tpu.reciprocal %19 {approx = true} : vector<8x1xf32> -> vector<8x1xf32>
    %21 = vector.broadcast %20 : vector<8x1xf32> to vector<8x8xf32>
    %22 = arith.mulf %17, %21 : vector<8x8xf32>
    %23 = arith.truncf %22 : vector<8x8xf32> to vector<8x8xbf16>
    %cst_6 = arith.constant dense<0.000000e+00> : vector<8x32xf32>
    %24 = tpu.matmul %23, %5, %cst_6 {dimension_numbers = #tpu.dot_dimension_numbers<[1], [0], [0], [1], [0, 0, 1, 1], [], []>} : vector<8x8xbf16>, vector<8x32xbf16>, vector<8x32xf32> -> vector<8x32xf32>
    %c0_7 = arith.constant 0 : index
    %c0_8 = arith.constant 0 : index
    %25 = vector.load %arg7[%c0_7, %c0_8] : memref<32x32xbf16, #tpu.memory_space<vmem>>, vector<32x32xbf16>
    %cst_9 = arith.constant dense<0.000000e+00> : vector<8x32xf32>
    %26 = tpu.matmul %7, %25, %cst_9 {dimension_numbers = #tpu.dot_dimension_numbers<[1], [0], [0], [1], [0, 0, 1, 1], [], []>} : vector<8x32xbf16>, vector<32x32xbf16>, vector<8x32xf32> -> vector<8x32xf32>
    %27 = arith.truncf %24 : vector<8x32xf32> to vector<8x32xbf16>
    %c0_10 = arith.constant 0 : index
    %c0_11 = arith.constant 0 : index
    %28 = vector.load %arg8[%c0_10, %c0_11] : memref<32x32xbf16, #tpu.memory_space<vmem>>, vector<32x32xbf16>
    %cst_12 = arith.constant dense<0.000000e+00> : vector<8x32xf32>
    %29 = tpu.matmul %27, %28, %cst_12 {dimension_numbers = #tpu.dot_dimension_numbers<[1], [0], [0], [1], [0, 0, 1, 1], [], []>} : vector<8x32xbf16>, vector<32x32xbf16>, vector<8x32xf32> -> vector<8x32xf32>
    %30 = arith.addf %26, %29 : vector<8x32xf32>
    %c0_13 = arith.constant 0 : index
    %c0_14 = arith.constant 0 : index
    %31 = vector.load %arg9[%c0_13, %c0_14] : memref<1x32xf32, #tpu.memory_space<vmem>>, vector<1x32xf32>
    %32 = vector.broadcast %31 : vector<1x32xf32> to vector<8x32xf32>
    %33 = arith.addf %30, %32 : vector<8x32xf32>
    %cst_15 = arith.constant 0.000000e+00 : f32
    %34 = vector.broadcast %cst_15 : f32 to vector<8x32xf32>
    %35 = arith.cmpf ogt, %33, %34 : vector<8x32xf32>
    %36 = math.exp %33 : vector<8x32xf32>
    %cst_16 = arith.constant 1.000000e+00 : f32
    %37 = vector.broadcast %cst_16 : f32 to vector<8x32xf32>
    %38 = arith.subf %36, %37 : vector<8x32xf32>
    %cst_17 = arith.constant 1.67326319 : f32
    %39 = vector.broadcast %cst_17 : f32 to vector<8x32xf32>
    %40 = arith.mulf %39, %38 : vector<8x32xf32>
    %41 = arith.select %35, %33, %40 : vector<8x32xi1>, vector<8x32xf32>
    %cst_18 = arith.constant 1.05070102 : f32
    %42 = vector.broadcast %cst_18 : f32 to vector<8x32xf32>
    %43 = arith.mulf %42, %41 : vector<8x32xf32>
    %44 = arith.truncf %43 : vector<8x32xf32> to vector<8x32xbf16>
    %c0_19 = arith.constant 0 : index
    %c0_20 = arith.constant 0 : index
    %45 = vector.load %arg10[%c0_19, %c0_20] : memref<32x32xbf16, #tpu.memory_space<vmem>>, vector<32x32xbf16>
    %cst_21 = arith.constant dense<0.000000e+00> : vector<8x32xf32>
    %46 = tpu.matmul %44, %45, %cst_21 {dimension_numbers = #tpu.dot_dimension_numbers<[1], [0], [0], [1], [0, 0, 1, 1], [], []>} : vector<8x32xbf16>, vector<32x32xbf16>, vector<8x32xf32> -> vector<8x32xf32>
    %c0_22 = arith.constant 0 : index
    %c0_23 = arith.constant 0 : index
    %47 = vector.load %arg11[%c0_22, %c0_23] : memref<1x32xf32, #tpu.memory_space<vmem>>, vector<1x32xf32>
    %48 = vector.broadcast %47 : vector<1x32xf32> to vector<8x32xf32>
    %49 = arith.addf %46, %48 : vector<8x32xf32>
    %cst_24 = arith.constant 0.000000e+00 : f32
    %50 = vector.broadcast %cst_24 : f32 to vector<8x32xf32>
    %51 = arith.cmpf ogt, %49, %50 : vector<8x32xf32>
    %52 = math.exp %49 : vector<8x32xf32>
    %cst_25 = arith.constant 1.000000e+00 : f32
    %53 = vector.broadcast %cst_25 : f32 to vector<8x32xf32>
    %54 = arith.subf %52, %53 : vector<8x32xf32>
    %cst_26 = arith.constant 1.67326319 : f32
    %55 = vector.broadcast %cst_26 : f32 to vector<8x32xf32>
    %56 = arith.mulf %55, %54 : vector<8x32xf32>
    %57 = arith.select %51, %49, %56 : vector<8x32xi1>, vector<8x32xf32>
    %cst_27 = arith.constant 1.05070102 : f32
    %58 = vector.broadcast %cst_27 : f32 to vector<8x32xf32>
    %59 = arith.mulf %58, %57 : vector<8x32xf32>
    %c0_28 = arith.constant 0 : index
    %60 = arith.index_cast %4 : i32 to index
    %c0_29 = arith.constant 0 : index
    %61 = vector.load %arg2[%c0_28, %60, %c0_29] : memref<1x8x32xf32, #tpu.memory_space<vmem>>, vector<1x8x32xf32>
    %62 = vector.shape_cast %61 : vector<1x8x32xf32> to vector<8x32xf32>
    %63 = arith.addf %59, %62 : vector<8x32xf32>
    %c0_30 = arith.constant 0 : index
    %c0_31 = arith.constant 0 : index
    %c0_32 = arith.constant 0 : index
    %64 = vector.load %arg12[%c0_30, %c0_31, %c0_32] : memref<1x8x32xf32, #tpu.memory_space<vmem>>, vector<1x8x32xf32>
    %65 = vector.shape_cast %64 : vector<1x8x32xf32> to vector<8x32xf32>
    %66 = vector.shape_cast %63 : vector<8x32xf32> to vector<1x8x32xf32>
    tpu.vector_store %arg12[%c0_30, %c0_31, %c0_32], %66 {strides = array<i32>} : memref<1x8x32xf32, #tpu.memory_space<vmem>>, vector<1x8x32xf32>,
    %c0_33 = arith.constant 0 : index
    %c0_34 = arith.constant 0 : index
    %c0_35 = arith.constant 0 : index
    %67 = vector.load %arg13[%c0_33, %c0_34, %c0_35] : memref<1x8x8xbf16, #tpu.memory_space<vmem>>, vector<1x8x8xbf16>
    %68 = vector.shape_cast %67 : vector<1x8x8xbf16> to vector<8x8xbf16>
    %69 = vector.shape_cast %23 : vector<8x8xbf16> to vector<1x8x8xbf16>
    tpu.vector_store %arg13[%c0_33, %c0_34, %c0_35], %69 {strides = array<i32>} : memref<1x8x8xbf16, #tpu.memory_space<vmem>>, vector<1x8x8xbf16>,
    return
  }
  func.func @transform_0(%arg0: i32, %arg1: i32) -> (i32, i32, i32) {
    %c0_i32 = arith.constant 0 : i32
    %c0_i32_0 = arith.constant 0 : i32
    %c0_i32_1 = arith.constant 0 : i32
    return %arg0, %c0_i32, %c0_i32_0 : i32, i32, i32
  }
  func.func @transform_1(%arg0: i32, %arg1: i32) -> (i32, i32) {
    %c0_i32 = arith.constant 0 : i32
    %c0_i32_0 = arith.constant 0 : i32
    %c0_i32_1 = arith.constant 0 : i32
    return %c0_i32, %c0_i32_0 : i32, i32
  }
  func.func @transform_2(%arg0: i32, %arg1: i32) -> (i32, i32) {
    %c0_i32 = arith.constant 0 : i32
    %c0_i32_0 = arith.constant 0 : i32
    %c0_i32_1 = arith.constant 0 : i32
    return %c0_i32, %c0_i32_0 : i32, i32
  }
  func.func @transform_3(%arg0: i32, %arg1: i32) -> (i32, i32) {
    %c0_i32 = arith.constant 0 : i32
    %c0_i32_0 = arith.constant 0 : i32
    %c0_i32_1 = arith.constant 0 : i32
    return %c0_i32, %c0_i32_0 : i32, i32
  }
  func.func @transform_4(%arg0: i32, %arg1: i32) -> (i32, i32) {
    %c0_i32 = arith.constant 0 : i32
    %c0_i32_0 = arith.constant 0 : i32
    %c0_i32_1 = arith.constant 0 : i32
    return %c0_i32, %c0_i32_0 : i32, i32
  }
  func.func @transform_5(%arg0: i32, %arg1: i32) -> (i32, i32) {
    %c0_i32 = arith.constant 0 : i32
    %c0_i32_0 = arith.constant 0 : i32
    %c0_i32_1 = arith.constant 0 : i32
    return %c0_i32, %c0_i32_0 : i32, i32
  }
  func.func @transform_6(%arg0: i32, %arg1: i32) -> (i32, i32) {
    %c0_i32 = arith.constant 0 : i32
    %c0_i32_0 = arith.constant 0 : i32
    %c0_i32_1 = arith.constant 0 : i32
    return %c0_i32, %c0_i32_0 : i32, i32
  }
  func.func @transform_7(%arg0: i32, %arg1: i32) -> (i32, i32) {
    %c0_i32 = arith.constant 0 : i32
    %c0_i32_0 = arith.constant 0 : i32
    %c0_i32_1 = arith.constant 0 : i32
    return %c0_i32, %c0_i32_0 : i32, i32
  }
  func.func @transform_8(%arg0: i32, %arg1: i32) -> (i32, i32) {
    %c0_i32 = arith.constant 0 : i32
    %c0_i32_0 = arith.constant 0 : i32
    %c0_i32_1 = arith.constant 0 : i32
    return %c0_i32, %c0_i32_0 : i32, i32
  }
  func.func @transform_9(%arg0: i32, %arg1: i32) -> (i32, i32) {
    %c0_i32 = arith.constant 0 : i32
    %c0_i32_0 = arith.constant 0 : i32
    %c0_i32_1 = arith.constant 0 : i32
    return %c0_i32, %c0_i32_0 : i32, i32
  }
  func.func @transform_10(%arg0: i32, %arg1: i32) -> (i32, i32, i32) {
    %c0_i32 = arith.constant 0 : i32
    %c0_i32_0 = arith.constant 0 : i32
    return %arg0, %arg1, %c0_i32 : i32, i32, i32
  }
  func.func @transform_11(%arg0: i32, %arg1: i32) -> (i32, i32, i32) {
    %c0_i32 = arith.constant 0 : i32
    %c0_i32_0 = arith.constant 0 : i32
    return %arg0, %arg1, %c0_i32 : i32, i32, i32
  }
}

</mosaic_0001>

<llo_original>
// kernel: tpu_custom_call.1
$region0: #{tpu_custom_call.1}
  #allocation0 [shape = 'u32[]', space=smem, size = 0x4, offset = 0x4, fixed_abs, tag = 'smem constant byte address 0x4 - core index']
  #allocation1 [shape = 'u32[144,128]{1,0:T(1,128)}', space=vmem, size = 0x12000, scoped, tag = 'internal scratch']
  #allocation2 [shape = 'bf16[8,32]{1,0:T(8,128)(2,1)}', space=vmem, size = 0x800, scoped, tag = 'scratch operand']
  %s0 = inlined_call_operand.hbm [shape: f32[2,8,32], index: 0, kind: input, shape index: {}]
  %s1 = inlined_call_operand.hbm [shape: bf16[32,32], index: 1, kind: input, shape index: {}]
  %s2 = inlined_call_operand.hbm [shape: f32[1,32], index: 2, kind: input, shape index: {}]
  %s3 = inlined_call_operand.hbm [shape: bf16[32,32], index: 3, kind: input, shape index: {}]
  %s4 = inlined_call_operand.hbm [shape: f32[1,32], index: 4, kind: input, shape index: {}]
  %s5 = inlined_call_operand.hbm [shape: bf16[32,32], index: 5, kind: input, shape index: {}]
  %s6 = inlined_call_operand.hbm [shape: bf16[32,32], index: 6, kind: input, shape index: {}]
  %s7 = inlined_call_operand.hbm [shape: f32[1,32], index: 7, kind: input, shape index: {}]
  %s8 = inlined_call_operand.hbm [shape: bf16[32,32], index: 8, kind: input, shape index: {}]
  %s9 = inlined_call_operand.hbm [shape: f32[1,32], index: 9, kind: input, shape index: {}]
  %s10 = inlined_call_operand.hbm [shape: f32[2,8,32], index: 10, kind: output, shape index: {0}]
  %s11 = inlined_call_operand.hbm [shape: bf16[2,8,8], index: 11, kind: output, shape index: {1}]
  %12 = xla_tuple %s10, %s11
  %s13 = sld [smem:[#allocation0]]
  $region125: #{tpu_custom_call.1} parent=0
    _
  %s15 = ssub.s32 1, %s13
  %s16 = scalar_select 0, %s15, %s13
  $region1: #{tpu_custom_call.1} parent=0
    #allocation3 [shape = 'u8[8192]{0}', space=vmem, size = 0x2000, scoped, tag = 'input window, operand 0']
    #allocation4 [shape = 's32[2]{0}', space=sflag, size = 0x8, scoped, tag = 'scoped memory for tpu_custom_call.1']
    #allocation5 [shape = 's32[2]{0}', space=sflag, size = 0x8, scoped, tag = 'scoped memory for tpu_custom_call.1']
    #allocation6 [shape = 'u8[8192]{0}', space=vmem, size = 0x2000, scoped, tag = 'input window, operand 1, single buffered']
    #allocation7 [shape = 's32[1]{0}', space=sflag, size = 0x4, scoped, tag = 'scoped memory for tpu_custom_call.1']
    #allocation8 [shape = 'u8[512]{0}', space=vmem, size = 0x400, scoped, tag = 'input window, operand 2, single buffered']
    #allocation9 [shape = 'u8[8192]{0}', space=vmem, size = 0x2000, scoped, tag = 'input window, operand 3, single buffered']
    #allocation10 [shape = 's32[1]{0}', space=sflag, size = 0x4, scoped, tag = 'scoped memory for tpu_custom_call.1']
    #allocation11 [shape = 'u8[512]{0}', space=vmem, size = 0x400, scoped, tag = 'input window, operand 4, single buffered']
    #allocation12 [shape = 'u8[8192]{0}', space=vmem, size = 0x2000, scoped, tag = 'input window, operand 5, single buffered']
    #allocation13 [shape = 's32[1]{0}', space=sflag, size = 0x4, scoped, tag = 'scoped memory for tpu_custom_call.1']
    #allocation14 [shape = 'u8[8192]{0}', space=vmem, size = 0x2000, scoped, tag = 'input window, operand 6, single buffered']
    #allocation15 [shape = 'u8[512]{0}', space=vmem, size = 0x400, scoped, tag = 'input window, operand 7, single buffered']
    #allocation16 [shape = 's32[1]{0}', space=sflag, size = 0x4, scoped, tag = 'scoped memory for tpu_custom_call.1']
    #allocation17 [shape = 'u8[8192]{0}', space=vmem, size = 0x2000, scoped, tag = 'input window, operand 8, single buffered']
    #allocation18 [shape = 'u8[512]{0}', space=vmem, size = 0x400, scoped, tag = 'input window, operand 9, single buffered']
    #allocation19 [shape = 's32[1]{0}', space=sflag, size = 0x4, scoped, tag = 'scoped memory for tpu_custom_call.1']
    #allocation20 [shape = 'u8[8192]{0}', space=vmem, size = 0x2000, scoped, tag = 'output window, operand 0']
    #allocation21 [shape = 'u8[4096]{0}', space=vmem, size = 0x1000, scoped, tag = 'output window, operand 1']
    #allocation22 [shape = 's32[2]{0}', space=sflag, size = 0x8, scoped, tag = 'scoped memory for tpu_custom_call.1']
    %17 = vsyncpa [#allocation4], 0
    %s18 = scalar_lea.sflag [#allocation4], 1
    %19 = vsyncpa %s18, 0
    %20 = vsyncpa [#allocation7], 0
    %21 = vsyncpa [#allocation10], 0
    %22 = vsyncpa [#allocation13], 0
    %23 = vsyncpa [#allocation16], 0
    %24 = vsyncpa [#allocation19], 0
    %25 = vsyncpa [#allocation5], 0
    %s26 = scalar_lea.sflag [#allocation5], 1
    %27 = vsyncpa %s26, 0
    %28 = vsyncpa [#allocation22], 0
    %s29 = scalar_lea.sflag [#allocation22], 1
    %30 = vsyncpa %s29, 0
    loop: start=0, step=1, limit=4
    $region2: #{tpu_custom_call.1} parent=1 // loop_pre_header
      _
    $region3: #{tpu_custom_call.1} parent=1 // loop_header
      %s32 = sphi 0, %s36
      %p33 = scmp.ge.s32.totalorder %s32, 4
      %s39 = sphi 0, %s51
      %s40 = sphi 0, %s47
      %s41 = sphi 0, %s39
      %s42 = sphi 0, %s40
      %s43 = sphi 0, %s41
      %s44 = sphi 0, %s42
      %s54 = sphi 0, %s56
      %s57 = sphi 0, %s54
      %s58 = sphi 0, %s57
      %s74 = sphi 0, %s58
      %s78 = sphi 0, %s78
      %s80 = sphi 0, %s78
      %s81 = sphi 0, %s80
      %s95 = sphi 0, %s81
      %s99 = sphi 0, %s99
      %s101 = sphi 0, %s99
      %s102 = sphi 0, %s101
      %s116 = sphi 0, %s102
      %s120 = sphi 0, %s120
      %s122 = sphi 0, %s120
      %s123 = sphi 0, %s122
      %s137 = sphi 0, %s123
      %s141 = sphi 0, %s141
      %s143 = sphi 0, %s141
      %s144 = sphi 0, %s143
      %s158 = sphi 0, %s144
      %s162 = sphi 0, %s162
      %s164 = sphi 0, %s162
      %s165 = sphi 0, %s164
      %s179 = sphi 0, %s165
      %s183 = sphi 0, %s183
      %s185 = sphi 0, %s183
      %s186 = sphi 0, %s185
      %s200 = sphi 0, %s186
      %s204 = sphi 0, %s204
      %s206 = sphi 0, %s204
      %s207 = sphi 0, %s206
      %s221 = sphi 0, %s207
      %s225 = sphi 0, %s225
      %s227 = sphi 0, %s225
      %s228 = sphi 0, %s227
      %s242 = sphi 0, %s228
      %s246 = sphi 0, %s246
      %s248 = sphi 0, %s246
      %s249 = sphi 0, %s248
      %s263 = sphi 0, %s249
      %s271 = sphi 0, %s273
      %s274 = sphi 0, %s271
      %s275 = sphi 0, %s274
      %s291 = sphi 0, %s275
      %s299 = sphi 0, %s301
      %s302 = sphi 0, %s299
      %s303 = sphi 0, %s302
      %s319 = sphi 0, %s303
    $region4: #{tpu_custom_call.1} parent=1 // loop_header_branch
      %35 = sbr.rel (%p33) target = $region8
    $region5: #{tpu_custom_call.1} parent=1 // loop_body
      %s37 = ssub.s32 %s32, 1
      %s38 = ssub.s32 %s32, 2
      %s45 = sadd.s32 1, %s40
      %p46 = scmp.ge.s32.totalorder %s45, 1
      %s47 = scalar_select %p46, 0, %s45
      %s48 = sadd.s32 1, %s39
      %s49 = scalar_select %p46, %s48, %s39
      %p50 = scmp.ge.s32.totalorder %s49, 2
      %s51 = scalar_select %p50, 0, %s49
      %s52 = ssub.s32 %s39, %s51
      %p53 = scmp.eq.s32.totalorder %s52, 0
      %s55 = sadd.s32 %s54, 1
      %s56 = scalar_select %p53, %s54, %s55
      %p59 = pneg %p53
      %p60 = scmp.eq.s32.totalorder %s32, 1
      %p61 = por %p59, %p60
      %p62 = scmp.ne.s32.totalorder %s54, %s57
      %p63 = scmp.eq.s32.totalorder %s32, 0
      %p64 = por %p62, %p63
      %p65 = scmp.ne.s32.totalorder %s54, %s57
      %p66 = scmp.eq.s32.totalorder %s37, 1
      %p67 = por %p65, %p66
      %p68 = scmp.ne.s32.totalorder %s57, %s58
      %p69 = scmp.eq.s32.totalorder %s37, 0
      %p70 = por %p68, %p69
      %p71 = scmp.ne.s32.totalorder %s57, %s58
      %p72 = scmp.eq.s32.totalorder %s38, 1
      %p73 = por %p71, %p72
      %p75 = scmp.ne.s32.totalorder %s58, %s74
      %p76 = scmp.eq.s32.totalorder %s38, 0
      %p77 = por %p75, %p76
      %s79 = sadd.s32 %s78, 1
      %p82 = scmp.eq.s32.totalorder %s32, 1
      %p83 = scmp.ne.s32.totalorder %s78, %s80
      %p84 = scmp.eq.s32.totalorder %s32, 0
      %p85 = por %p83, %p84
      %p86 = scmp.ne.s32.totalorder %s78, %s80
      %p87 = scmp.eq.s32.totalorder %s37, 1
      %p88 = por %p86, %p87
      %p89 = scmp.ne.s32.totalorder %s80, %s81
      %p90 = scmp.eq.s32.totalorder %s37, 0
      %p91 = por %p89, %p90
      %p92 = scmp.ne.s32.totalorder %s80, %s81
      %p93 = scmp.eq.s32.totalorder %s38, 1
      %p94 = por %p92, %p93
      %p96 = scmp.ne.s32.totalorder %s81, %s95
      %p97 = scmp.eq.s32.totalorder %s38, 0
      %p98 = por %p96, %p97
      %s100 = sadd.s32 %s99, 1
      %p103 = scmp.eq.s32.totalorder %s32, 1
      %p104 = scmp.ne.s32.totalorder %s99, %s101
      %p105 = scmp.eq.s32.totalorder %s32, 0
      %p106 = por %p104, %p105
      %p107 = scmp.ne.s32.totalorder %s99, %s101
      %p108 = scmp.eq.s32.totalorder %s37, 1
      %p109 = por %p107, %p108
      %p110 = scmp.ne.s32.totalorder %s101, %s102
      %p111 = scmp.eq.s32.totalorder %s37, 0
      %p112 = por %p110, %p111
      %p113 = scmp.ne.s32.totalorder %s101, %s102
      %p114 = scmp.eq.s32.totalorder %s38, 1
      %p115 = por %p113, %p114
      %p117 = scmp.ne.s32.totalorder %s102, %s116
      %p118 = scmp.eq.s32.totalorder %s38, 0
      %p119 = por %p117, %p118
      %s121 = sadd.s32 %s120, 1
      %p124 = scmp.eq.s32.totalorder %s32, 1
      %p125 = scmp.ne.s32.totalorder %s120, %s122
      %p126 = scmp.eq.s32.totalorder %s32, 0
      %p127 = por %p125, %p126
      %p128 = scmp.ne.s32.totalorder %s120, %s122
      %p129 = scmp.eq.s32.totalorder %s37, 1
      %p130 = por %p128, %p129
      %p131 = scmp.ne.s32.totalorder %s122, %s123
      %p132 = scmp.eq.s32.totalorder %s37, 0
      %p133 = por %p131, %p132
      %p134 = scmp.ne.s32.totalorder %s122, %s123
      %p135 = scmp.eq.s32.totalorder %s38, 1
      %p136 = por %p134, %p135
      %p138 = scmp.ne.s32.totalorder %s123, %s137
      %p139 = scmp.eq.s32.totalorder %s38, 0
      %p140 = por %p138, %p139
      %s142 = sadd.s32 %s141, 1
      %p145 = scmp.eq.s32.totalorder %s32, 1
      %p146 = scmp.ne.s32.totalorder %s141, %s143
      %p147 = scmp.eq.s32.totalorder %s32, 0
      %p148 = por %p146, %p147
      %p149 = scmp.ne.s32.totalorder %s141, %s143
      %p150 = scmp.eq.s32.totalorder %s37, 1
      %p151 = por %p149, %p150
      %p152 = scmp.ne.s32.totalorder %s143, %s144
      %p153 = scmp.eq.s32.totalorder %s37, 0
      %p154 = por %p152, %p153
      %p155 = scmp.ne.s32.totalorder %s143, %s144
      %p156 = scmp.eq.s32.totalorder %s38, 1
      %p157 = por %p155, %p156
      %p159 = scmp.ne.s32.totalorder %s144, %s158
      %p160 = scmp.eq.s32.totalorder %s38, 0
      %p161 = por %p159, %p160
      %s163 = sadd.s32 %s162, 1
      %p166 = scmp.eq.s32.totalorder %s32, 1
      %p167 = scmp.ne.s32.totalorder %s162, %s164
      %p168 = scmp.eq.s32.totalorder %s32, 0
      %p169 = por %p167, %p168
      %p170 = scmp.ne.s32.totalorder %s162, %s164
      %p171 = scmp.eq.s32.totalorder %s37, 1
      %p172 = por %p170, %p171
      %p173 = scmp.ne.s32.totalorder %s164, %s165
      %p174 = scmp.eq.s32.totalorder %s37, 0
      %p175 = por %p173, %p174
      %p176 = scmp.ne.s32.totalorder %s164, %s165
      %p177 = scmp.eq.s32.totalorder %s38, 1
      %p178 = por %p176, %p177
      %p180 = scmp.ne.s32.totalorder %s165, %s179
      %p181 = scmp.eq.s32.totalorder %s38, 0
      %p182 = por %p180, %p181
      %s184 = sadd.s32 %s183, 1
      %p187 = scmp.eq.s32.totalorder %s32, 1
      %p188 = scmp.ne.s32.totalorder %s183, %s185
      %p189 = scmp.eq.s32.totalorder %s32, 0
      %p190 = por %p188, %p189
      %p191 = scmp.ne.s32.totalorder %s183, %s185
      %p192 = scmp.eq.s32.totalorder %s37, 1
      %p193 = por %p191, %p192
      %p194 = scmp.ne.s32.totalorder %s185, %s186
      %p195 = scmp.eq.s32.totalorder %s37, 0
      %p196 = por %p194, %p195
      %p197 = scmp.ne.s32.totalorder %s185, %s186
      %p198 = scmp.eq.s32.totalorder %s38, 1
      %p199 = por %p197, %p198
      %p201 = scmp.ne.s32.totalorder %s186, %s200
      %p202 = scmp.eq.s32.totalorder %s38, 0
      %p203 = por %p201, %p202
      %s205 = sadd.s32 %s204, 1
      %p208 = scmp.eq.s32.totalorder %s32, 1
      %p209 = scmp.ne.s32.totalorder %s204, %s206
      %p210 = scmp.eq.s32.totalorder %s32, 0
      %p211 = por %p209, %p210
      %p212 = scmp.ne.s32.totalorder %s204, %s206
      %p213 = scmp.eq.s32.totalorder %s37, 1
      %p214 = por %p212, %p213
      %p215 = scmp.ne.s32.totalorder %s206, %s207
      %p216 = scmp.eq.s32.totalorder %s37, 0
      %p217 = por %p215, %p216
      %p218 = scmp.ne.s32.totalorder %s206, %s207
      %p219 = scmp.eq.s32.totalorder %s38, 1
      %p220 = por %p218, %p219
      %p222 = scmp.ne.s32.totalorder %s207, %s221
      %p223 = scmp.eq.s32.totalorder %s38, 0
      %p224 = por %p222, %p223
      %s226 = sadd.s32 %s225, 1
      %p229 = scmp.eq.s32.totalorder %s32, 1
      %p230 = scmp.ne.s32.totalorder %s225, %s227
      %p231 = scmp.eq.s32.totalorder %s32, 0
      %p232 = por %p230, %p231
      %p233 = scmp.ne.s32.totalorder %s225, %s227
      %p234 = scmp.eq.s32.totalorder %s37, 1
      %p235 = por %p233, %p234
      %p236 = scmp.ne.s32.totalorder %s227, %s228
      %p237 = scmp.eq.s32.totalorder %s37, 0
      %p238 = por %p236, %p237
      %p239 = scmp.ne.s32.totalorder %s227, %s228
      %p240 = scmp.eq.s32.totalorder %s38, 1
      %p241 = por %p239, %p240
      %p243 = scmp.ne.s32.totalorder %s228, %s242
      %p244 = scmp.eq.s32.totalorder %s38, 0
      %p245 = por %p243, %p244
      %s247 = sadd.s32 %s246, 1
      %p250 = scmp.eq.s32.totalorder %s32, 1
      %p251 = scmp.ne.s32.totalorder %s246, %s248
      %p252 = scmp.eq.s32.totalorder %s32, 0
      %p253 = por %p251, %p252
      %p254 = scmp.ne.s32.totalorder %s246, %s248
      %p255 = scmp.eq.s32.totalorder %s37, 1
      %p256 = por %p254, %p255
      %p257 = scmp.ne.s32.totalorder %s248, %s249
      %p258 = scmp.eq.s32.totalorder %s37, 0
      %p259 = por %p257, %p258
      %p260 = scmp.ne.s32.totalorder %s248, %s249
      %p261 = scmp.eq.s32.totalorder %s38, 1
      %p262 = por %p260, %p261
      %p264 = scmp.ne.s32.totalorder %s249, %s263
      %p265 = scmp.eq.s32.totalorder %s38, 0
      %p266 = por %p264, %p265
      %s267 = ssub.s32 %s39, %s51
      %s268 = ssub.s32 %s40, %s47
      %s269 = sor.u32 %s267, %s268
      %p270 = scmp.eq.s32.totalorder %s269, 0
      %s272 = sadd.s32 %s271, 1
      %s273 = scalar_select %p270, %s271, %s272
      %p276 = pneg %p270
      %p277 = scmp.eq.s32.totalorder %s32, 1
      %p278 = por %p276, %p277
      %p279 = scmp.ne.s32.totalorder %s271, %s274
      %p280 = scmp.eq.s32.totalorder %s32, 0
      %p281 = por %p279, %p280
      %p282 = scmp.ne.s32.totalorder %s271, %s274
      %p283 = scmp.eq.s32.totalorder %s37, 1
      %p284 = por %p282, %p283
      %p285 = scmp.ne.s32.totalorder %s274, %s275
      %p286 = scmp.eq.s32.totalorder %s37, 0
      %p287 = por %p285, %p286
      %p288 = scmp.ne.s32.totalorder %s274, %s275
      %p289 = scmp.eq.s32.totalorder %s38, 1
      %p290 = por %p288, %p289
      %p292 = scmp.ne.s32.totalorder %s275, %s291
      %p293 = scmp.eq.s32.totalorder %s38, 0
      %p294 = por %p292, %p293
      %s295 = ssub.s32 %s39, %s51
      %s296 = ssub.s32 %s40, %s47
      %s297 = sor.u32 %s295, %s296
      %p298 = scmp.eq.s32.totalorder %s297, 0
      %s300 = sadd.s32 %s299, 1
      %s301 = scalar_select %p298, %s299, %s300
      %p304 = pneg %p298
      %p305 = scmp.eq.s32.totalorder %s32, 1
      %p306 = por %p304, %p305
      %p307 = scmp.ne.s32.totalorder %s299, %s302
      %p308 = scmp.eq.s32.totalorder %s32, 0
      %p309 = por %p307, %p308
      %p310 = scmp.ne.s32.totalorder %s299, %s302
      %p311 = scmp.eq.s32.totalorder %s37, 1
      %p312 = por %p310, %p311
      %p313 = scmp.ne.s32.totalorder %s302, %s303
      %p314 = scmp.eq.s32.totalorder %s37, 0
      %p315 = por %p313, %p314
      %p316 = scmp.ne.s32.totalorder %s302, %s303
      %p317 = scmp.eq.s32.totalorder %s38, 1
      %p318 = por %p316, %p317
      %p320 = scmp.ne.s32.totalorder %s303, %s319
      %p321 = scmp.eq.s32.totalorder %s38, 0
      %p322 = por %p320, %p321
      %p323 = scmp.le.s32.totalorder 1, %s32
      %p324 = scmp.lt.s32.totalorder %s32, 3
      %p325 = pnand %p323, %p324
      %p326 = pneg %p325
      // Predicated region
      $region9: #{tpu_custom_call.1} parent=5 // pred_check
        _
      $region10: #{tpu_custom_call.1} parent=5 // pred_check_branch
        %328 = sbr.rel (%p325) target = $region12
      $region11: #{tpu_custom_call.1} parent=5 // pred_region
        %s329 = ssub.s32 %s32, 1
        // Predicated region
        $region13: #{tpu_custom_call.1} parent=11 // pred_check
          %p330 = pneg %p91
        $region14: #{tpu_custom_call.1} parent=11 // pred_check_branch
          %332 = sbr.rel (%p330) target = $region16
        $region15: #{tpu_custom_call.1} parent=11 // pred_region
          %s334 = ssub.s32 256, 256
          %335 = vsyncadd [#allocation7], %s334
          %s336 = sshll.u32 [#allocation6], 4
          %s337 = int_to_ptr.vmem [resolvable:$true] %s336
          %342 = dma.hbm_to_vmem [thread:$0]  %s1, 256, %s337, [#allocation7], 64, 64, 4
        $region16: #{tpu_custom_call.1} parent=11 // pred_fallthru
          _
        // Predicated region
        $region17: #{tpu_custom_call.1} parent=11 // pred_check
          %p343 = pneg %p112
        $region18: #{tpu_custom_call.1} parent=11 // pred_check_branch
          %345 = sbr.rel (%p343) target = $region20
        $region19: #{tpu_custom_call.1} parent=11 // pred_region
          %s347 = ssub.s32 16, 16
          %348 = vsyncadd [#allocation7], %s347
          %s350 = sshll.u32 [#allocation8], 4
          %s351 = int_to_ptr.vmem [resolvable:$true] %s350
          %353 = dma.hbm_to_vmem [thread:$0]  %s2, 16, %s351, [#allocation7]
        $region20: #{tpu_custom_call.1} parent=11 // pred_fallthru
          _
        // Predicated region
        $region21: #{tpu_custom_call.1} parent=11 // pred_check
          %p354 = pneg %p133
        $region22: #{tpu_custom_call.1} parent=11 // pred_check_branch
          %356 = sbr.rel (%p354) target = $region24
        $region23: #{tpu_custom_call.1} parent=11 // pred_region
          %s358 = ssub.s32 256, 256
          %359 = vsyncadd [#allocation10], %s358
          %s360 = sshll.u32 [#allocation9], 4
          %s361 = int_to_ptr.vmem [resolvable:$true] %s360
          %366 = dma.hbm_to_vmem [thread:$0]  %s3, 256, %s361, [#allocation10], 64, 64, 4
        $region24: #{tpu_custom_call.1} parent=11 // pred_fallthru
          _
        // Predicated region
        $region25: #{tpu_custom_call.1} parent=11 // pred_check
          %p367 = pneg %p154
        $region26: #{tpu_custom_call.1} parent=11 // pred_check_branch
          %369 = sbr.rel (%p367) target = $region28
        $region27: #{tpu_custom_call.1} parent=11 // pred_region
          %s371 = ssub.s32 16, 16
          %372 = vsyncadd [#allocation10], %s371
          %s374 = sshll.u32 [#allocation11], 4
          %s375 = int_to_ptr.vmem [resolvable:$true] %s374
          %377 = dma.hbm_to_vmem [thread:$0]  %s4, 16, %s375, [#allocation10]
        $region28: #{tpu_custom_call.1} parent=11 // pred_fallthru
          _
        // Predicated region
        $region29: #{tpu_custom_call.1} parent=11 // pred_check
          %p378 = pneg %p175
        $region30: #{tpu_custom_call.1} parent=11 // pred_check_branch
          %380 = sbr.rel (%p378) target = $region32
        $region31: #{tpu_custom_call.1} parent=11 // pred_region
          %s382 = ssub.s32 256, 256
          %383 = vsyncadd [#allocation13], %s382
          %s384 = sshll.u32 [#allocation12], 4
          %s385 = int_to_ptr.vmem [resolvable:$true] %s384
          %390 = dma.hbm_to_vmem [thread:$0]  %s5, 256, %s385, [#allocation13], 64, 64, 4
        $region32: #{tpu_custom_call.1} parent=11 // pred_fallthru
          _
        // Predicated region
        $region33: #{tpu_custom_call.1} parent=11 // pred_check
          %p391 = pneg %p196
        $region34: #{tpu_custom_call.1} parent=11 // pred_check_branch
          %393 = sbr.rel (%p391) target = $region36
        $region35: #{tpu_custom_call.1} parent=11 // pred_region
          %s395 = ssub.s32 256, 256
          %396 = vsyncadd [#allocation13], %s395
          %s397 = sshll.u32 [#allocation14], 4
          %s398 = int_to_ptr.vmem [resolvable:$true] %s397
          %403 = dma.hbm_to_vmem [thread:$0]  %s6, 256, %s398, [#allocation13], 64, 64, 4
        $region36: #{tpu_custom_call.1} parent=11 // pred_fallthru
          _
        // Predicated region
        $region37: #{tpu_custom_call.1} parent=11 // pred_check
          %p404 = pneg %p217
        $region38: #{tpu_custom_call.1} parent=11 // pred_check_branch
          %406 = sbr.rel (%p404) target = $region40
        $region39: #{tpu_custom_call.1} parent=11 // pred_region
          %s408 = ssub.s32 16, 16
          %409 = vsyncadd [#allocation16], %s408
          %s411 = sshll.u32 [#allocation15], 4
          %s412 = int_to_ptr.vmem [resolvable:$true] %s411
          %414 = dma.hbm_to_vmem [thread:$0]  %s7, 16, %s412, [#allocation16]
        $region40: #{tpu_custom_call.1} parent=11 // pred_fallthru
          _
        // Predicated region
        $region41: #{tpu_custom_call.1} parent=11 // pred_check
          %p415 = pneg %p238
        $region42: #{tpu_custom_call.1} parent=11 // pred_check_branch
          %417 = sbr.rel (%p415) target = $region44
        $region43: #{tpu_custom_call.1} parent=11 // pred_region
          %s419 = ssub.s32 256, 256
          %420 = vsyncadd [#allocation16], %s419
          %s421 = sshll.u32 [#allocation17], 4
          %s422 = int_to_ptr.vmem [resolvable:$true] %s421
          %427 = dma.hbm_to_vmem [thread:$0]  %s8, 256, %s422, [#allocation16], 64, 64, 4
        $region44: #{tpu_custom_call.1} parent=11 // pred_fallthru
          _
        // Predicated region
        $region45: #{tpu_custom_call.1} parent=11 // pred_check
          %p428 = pneg %p259
        $region46: #{tpu_custom_call.1} parent=11 // pred_check_branch
          %430 = sbr.rel (%p428) target = $region48
        $region47: #{tpu_custom_call.1} parent=11 // pred_region
          %s432 = ssub.s32 16, 16
          %433 = vsyncadd [#allocation19], %s432
          %s435 = sshll.u32 [#allocation18], 4
          %s436 = int_to_ptr.vmem [resolvable:$true] %s435
          %438 = dma.hbm_to_vmem [thread:$0]  %s9, 16, %s436, [#allocation19]
        $region48: #{tpu_custom_call.1} parent=11 // pred_fallthru
          _
      $region12: #{tpu_custom_call.1} parent=5 // pred_fallthru
        _
      %p439 = scmp.lt.s32.totalorder %s32, 2
      // Predicated region
      $region49: #{tpu_custom_call.1} parent=5 // pred_check
        %p440 = pneg %p439
      $region50: #{tpu_custom_call.1} parent=5 // pred_check_branch
        %442 = sbr.rel (%p440) target = $region52
      $region51: #{tpu_custom_call.1} parent=5 // pred_region
        // Predicated region
        $region53: #{tpu_custom_call.1} parent=51 // pred_check
          %p443 = pneg %p64
        $region54: #{tpu_custom_call.1} parent=51 // pred_check_branch
          %445 = sbr.rel (%p443) target = $region56
        $region55: #{tpu_custom_call.1} parent=51 // pred_region
          %s446 = sand.u32 %s54, 1
          %s447 = scalar_lea.sflag [#allocation4], %s446
          %s448 = sand.u32 %s54, 1
          %s449 = smul.addr %s448, 8
          %s450 = scalar_lea.vmem [#allocation3], %s449
          %s452 = ssub.s32 128, 128
          %453 = vsyncadd %s447, %s452
          %s454 = smul.addr %s39, 128
          %s455 = scalar_lea.hbm %s0, %s454
          %s457 = sshll.u32 %s450, 4
          %s458 = int_to_ptr.vmem [resolvable:$true] %s457
          %460 = dma.hbm_to_vmem [thread:$0]  %s455, 128, %s458, %s447
        $region56: #{tpu_custom_call.1} parent=51 // pred_fallthru
          _
      $region52: #{tpu_custom_call.1} parent=5 // pred_fallthru
        _
      %p461 = scmp.le.s32.totalorder 1, %s32
      %p462 = scmp.lt.s32.totalorder %s32, 3
      %p463 = pnand %p461, %p462
      %p464 = pneg %p463
      // Predicated region
      $region57: #{tpu_custom_call.1} parent=5 // pred_check
        _
      $region58: #{tpu_custom_call.1} parent=5 // pred_check_branch
        %466 = sbr.rel (%p463) target = $region60
      $region59: #{tpu_custom_call.1} parent=5 // pred_region
        %s467 = ssub.s32 %s32, 1
        %s468 = sand.u32 %s57, 1
        %s469 = scalar_lea.sflag [#allocation4], %s468
        %s470 = sand.u32 %s57, 1
        %s471 = smul.addr %s470, 8
        %s472 = scalar_lea.vmem [#allocation3], %s471
        // Predicated region
        $region61: #{tpu_custom_call.1} parent=59 // pred_check
          %p473 = pneg %p70
        $region62: #{tpu_custom_call.1} parent=59 // pred_check_branch
          %475 = sbr.rel (%p473) target = $region64
        $region63: #{tpu_custom_call.1} parent=59 // pred_region
          %476 = dma.done %s469, 128
        $region64: #{tpu_custom_call.1} parent=59 // pred_fallthru
          _
        // Predicated region
        $region65: #{tpu_custom_call.1} parent=59 // pred_check
          %p477 = pneg %p91
        $region66: #{tpu_custom_call.1} parent=59 // pred_check_branch
          %479 = sbr.rel (%p477) target = $region68
        $region67: #{tpu_custom_call.1} parent=59 // pred_region
          %480 = dma.done [#allocation7], 256
        $region68: #{tpu_custom_call.1} parent=59 // pred_fallthru
          _
        // Predicated region
        $region69: #{tpu_custom_call.1} parent=59 // pred_check
          %p481 = pneg %p112
        $region70: #{tpu_custom_call.1} parent=59 // pred_check_branch
          %483 = sbr.rel (%p481) target = $region72
        $region71: #{tpu_custom_call.1} parent=59 // pred_region
          %484 = dma.done [#allocation7], 16
        $region72: #{tpu_custom_call.1} parent=59 // pred_fallthru
          _
        // Predicated region
        $region73: #{tpu_custom_call.1} parent=59 // pred_check
          %p485 = pneg %p133
        $region74: #{tpu_custom_call.1} parent=59 // pred_check_branch
          %487 = sbr.rel (%p485) target = $region76
        $region75: #{tpu_custom_call.1} parent=59 // pred_region
          %488 = dma.done [#allocation10], 256
        $region76: #{tpu_custom_call.1} parent=59 // pred_fallthru
          _
        // Predicated region
        $region77: #{tpu_custom_call.1} parent=59 // pred_check
          %p489 = pneg %p154
        $region78: #{tpu_custom_call.1} parent=59 // pred_check_branch
          %491 = sbr.rel (%p489) target = $region80
        $region79: #{tpu_custom_call.1} parent=59 // pred_region
          %492 = dma.done [#allocation10], 16
        $region80: #{tpu_custom_call.1} parent=59 // pred_fallthru
          _
        // Predicated region
        $region81: #{tpu_custom_call.1} parent=59 // pred_check
          %p493 = pneg %p175
        $region82: #{tpu_custom_call.1} parent=59 // pred_check_branch
          %495 = sbr.rel (%p493) target = $region84
        $region83: #{tpu_custom_call.1} parent=59 // pred_region
          %496 = dma.done [#allocation13], 256
        $region84: #{tpu_custom_call.1} parent=59 // pred_fallthru
          _
        // Predicated region
        $region85: #{tpu_custom_call.1} parent=59 // pred_check
          %p497 = pneg %p196
        $region86: #{tpu_custom_call.1} parent=59 // pred_check_branch
          %499 = sbr.rel (%p497) target = $region88
        $region87: #{tpu_custom_call.1} parent=59 // pred_region
          %500 = dma.done [#allocation13], 256
        $region88: #{tpu_custom_call.1} parent=59 // pred_fallthru
          _
        // Predicated region
        $region89: #{tpu_custom_call.1} parent=59 // pred_check
          %p501 = pneg %p217
        $region90: #{tpu_custom_call.1} parent=59 // pred_check_branch
          %503 = sbr.rel (%p501) target = $region92
        $region91: #{tpu_custom_call.1} parent=59 // pred_region
          %504 = dma.done [#allocation16], 16
        $region92: #{tpu_custom_call.1} parent=59 // pred_fallthru
          _
        // Predicated region
        $region93: #{tpu_custom_call.1} parent=59 // pred_check
          %p505 = pneg %p238
        $region94: #{tpu_custom_call.1} parent=59 // pred_check_branch
          %507 = sbr.rel (%p505) target = $region96
        $region95: #{tpu_custom_call.1} parent=59 // pred_region
          %508 = dma.done [#allocation16], 256
        $region96: #{tpu_custom_call.1} parent=59 // pred_fallthru
          _
        // Predicated region
        $region97: #{tpu_custom_call.1} parent=59 // pred_check
          %p509 = pneg %p259
        $region98: #{tpu_custom_call.1} parent=59 // pred_check_branch
          %511 = sbr.rel (%p509) target = $region100
        $region99: #{tpu_custom_call.1} parent=59 // pred_region
          %512 = dma.done [#allocation19], 16
        $region100: #{tpu_custom_call.1} parent=59 // pred_fallthru
          _
        %s513 = sand.u32 %s57, 1
        %s514 = scalar_lea.sflag [#allocation4], %s513
        %s515 = sand.u32 %s57, 1
        %s516 = smul.addr %s515, 8
        %s517 = scalar_lea.vmem [#allocation3], %s516
        %p518 = pneg %p70
        %p519 = pneg %p67
        %p520 = pneg %p91
        %p521 = pneg %p88
        %p522 = pneg %p112
        %p523 = pneg %p109
        %p524 = pneg %p133
        %p525 = pneg %p130
        %p526 = pneg %p154
        %p527 = pneg %p151
        %p528 = pneg %p175
        %p529 = pneg %p172
        %p530 = pneg %p196
        %p531 = pneg %p193
        %p532 = pneg %p217
        %p533 = pneg %p214
        %p534 = pneg %p238
        %p535 = pneg %p235
        %p536 = pneg %p259
        %p537 = pneg %p256
        %p538 = pneg %p287
        %p539 = pneg %p284
        %s540 = sand.u32 %s274, 1
        %s541 = scalar_lea.sflag [#allocation5], %s540
        %s542 = sand.u32 %s274, 1
        %s543 = smul.addr %s542, 8
        %s544 = scalar_lea.vmem [#allocation20], %s543
        %p545 = pneg %p315
        %p546 = pneg %p312
        %s547 = sand.u32 %s302, 1
        %s548 = scalar_lea.sflag [#allocation22], %s547
        %s549 = sand.u32 %s302, 1
        %s550 = smul.addr %s549, 4
        %s551 = scalar_lea.vmem [#allocation21], %s550
        %p553 = scmp.eq.s32.totalorder %s42, 0
        // Predicated region
        $region101: #{tpu_custom_call.1} parent=59 // pred_check
          %p554 = pneg %p553
        $region102: #{tpu_custom_call.1} parent=59 // pred_check_branch
          %556 = sbr.rel (%p554) target = $region104
        $region103: #{tpu_custom_call.1} parent=59 // pred_region
          %v557 = vld [vmem:[%s472] sm:$0xff]
          %v558 = vpack.c.bf16 %v557, %v557
          %v559 = vld [vmem:[#allocation6] sm:$0xf]
          %v560 = vld [vmem:[#allocation6 + $0x4] sm:$0xf]
          %v561 = vld [vmem:[#allocation6 + $0x8] sm:$0xf]
          %v562 = vld [vmem:[#allocation6 + $0xc] sm:$0xf]
          %v563 = vld [vmem:[#allocation8] sm:$0x1]
          %v565 = vlaneseq
          %v566 = vshrl.u32 %v565, 7
          %v567 = vsub.s32 0, %v566
          %v568 = vrot.slane %v563, %v567
          %v574 = vunpack.c.l.b16 %v559
          %v575 = vunpack.c.l.b16 %v560
          %v576 = vunpack.c.l.b16 %v561
          %v577 = vunpack.c.l.b16 %v562
          %v578 = vpack.c.b16 %v575, %v574
          %v579 = vpack.c.b16 %v577, %v576
          %vm582 = vcmask 261120
          %v584 = vsel %vm582, %v558, 0
          %586 = vmatprep.subr.bf16.mxu0 0
          %587 = vmatpush1.bf16.msra.mxu0 %v578
          %588 = vmatprep.subr.bf16.mxu0 0
          %589 = vmatpush1.bf16.msra.mxu0 %v579
          %590 = vmatprep.subr.bf16.mxu0 0
          %591 = vmatpush1.bf16.msra.mxu0 0
          %592 = vmatprep.subr.bf16.mxu0 0
          %593 = vmatpush1.bf16.msra.mxu0 0
          %594 = vmatprep.subr.bf16.mxu0 0
          %595 = vmatpush1.bf16.msra.mxu0 0
          %596 = vmatprep.subr.bf16.mxu0 0
          %597 = vmatpush1.bf16.msra.mxu0 0
          %598 = vmatprep.subr.bf16.mxu0 0
          %599 = vmatpush1.bf16.msra.mxu0 0
          %600 = vmatprep.subr.bf16.mxu0 0
          %601 = vmatpush1.bf16.msra.mxu0 0
          %602 = vmatprep.subr.bf16.mxu0 0
          %603 = vmatpush1.bf16.msra.mxu0 0
          %604 = vmatprep.subr.bf16.mxu0 0
          %605 = vmatpush1.bf16.msra.mxu0 0
          %606 = vmatprep.subr.bf16.mxu0 0
          %607 = vmatpush1.bf16.msra.mxu0 0
          %608 = vmatprep.subr.bf16.mxu0 0
          %609 = vmatpush1.bf16.msra.mxu0 0
          %610 = vmatprep.subr.bf16.mxu0 0
          %611 = vmatpush1.bf16.msra.mxu0 0
          %612 = vmatprep.subr.bf16.mxu0 0
          %613 = vmatpush1.bf16.msra.mxu0 0
          %614 = vmatprep.subr.bf16.mxu0 0
          %615 = vmatpush1.bf16.msra.mxu0 0
          %616 = vmatprep.subr.bf16.mxu0 0
          %617 = vmatpush1.bf16.msra.mxu0 0
          %618 = vmatprep.mubr.bf16.mxu0 0
          %619 = vmatmul.mubr.bf16.gmra.mrb[0].mxu0 %v584
          %v620 = vpop.f32.mrb[0].mxu0
          %v621 = vadd.f32 %v568, %v620
          %v622 = vpop.f32.mrb[0].mxu0
          %v623 = vpop.f32.mrb[0].mxu0
          %v624 = vpop.f32.mrb[0].mxu0
          %625 = vdwg.mxu0
          %vm626 = vcmp.gt.f32.partialorder %v621, 0.0
          %v627 = vmul.f32 %v621, 1.442695
          %v628 = vpow.pop %v627
          %v629 = vsub.f32 %v628, 1.0
          %v630 = vmul.f32 %v629, 1.6732632
          %v631 = vsel %vm626, %v621, %v630
          %v632 = vmul.f32 %v631, 1.050701
          %v633 = vpack.c.bf16 %v632, %v632
          %v634 = vld [vmem:[#allocation9] sm:$0xf]
          %v635 = vld [vmem:[#allocation9 + $0x4] sm:$0xf]
          %v636 = vld [vmem:[#allocation9 + $0x8] sm:$0xf]
          %v637 = vld [vmem:[#allocation9 + $0xc] sm:$0xf]
          %v638 = vld [vmem:[#allocation11] sm:$0x1]
          %v640 = vlaneseq
          %v641 = vshrl.u32 %v640, 7
          %v642 = vsub.s32 0, %v641
          %v643 = vrot.slane %v638, %v642
          %v649 = vunpack.c.l.b16 %v634
          %v650 = vunpack.c.l.b16 %v635
          %v651 = vunpack.c.l.b16 %v636
          %v652 = vunpack.c.l.b16 %v637
          %v653 = vpack.c.b16 %v650, %v649
          %v654 = vpack.c.b16 %v652, %v651
          %v658 = vsel %vm582, %v633, 0
          %660 = vmatprep.subr.bf16.mxu0 0
          %661 = vmatpush1.bf16.msra.mxu0 %v653
          %662 = vmatprep.subr.bf16.mxu0 0
          %663 = vmatpush1.bf16.msra.mxu0 %v654
          %664 = vmatprep.subr.bf16.mxu0 0
          %665 = vmatpush1.bf16.msra.mxu0 0
          %666 = vmatprep.subr.bf16.mxu0 0
          %667 = vmatpush1.bf16.msra.mxu0 0
          %668 = vmatprep.subr.bf16.mxu0 0
          %669 = vmatpush1.bf16.msra.mxu0 0
          %670 = vmatprep.subr.bf16.mxu0 0
          %671 = vmatpush1.bf16.msra.mxu0 0
          %672 = vmatprep.subr.bf16.mxu0 0
          %673 = vmatpush1.bf16.msra.mxu0 0
          %674 = vmatprep.subr.bf16.mxu0 0
          %675 = vmatpush1.bf16.msra.mxu0 0
          %676 = vmatprep.subr.bf16.mxu0 0
          %677 = vmatpush1.bf16.msra.mxu0 0
          %678 = vmatprep.subr.bf16.mxu0 0
          %679 = vmatpush1.bf16.msra.mxu0 0
          %680 = vmatprep.subr.bf16.mxu0 0
          %681 = vmatpush1.bf16.msra.mxu0 0
          %682 = vmatprep.subr.bf16.mxu0 0
          %683 = vmatpush1.bf16.msra.mxu0 0
          %684 = vmatprep.subr.bf16.mxu0 0
          %685 = vmatpush1.bf16.msra.mxu0 0
          %686 = vmatprep.subr.bf16.mxu0 0
          %687 = vmatpush1.bf16.msra.mxu0 0
          %688 = vmatprep.subr.bf16.mxu0 0
          %689 = vmatpush1.bf16.msra.mxu0 0
          %690 = vmatprep.subr.bf16.mxu0 0
          %691 = vmatpush1.bf16.msra.mxu0 0
          %692 = vmatprep.mubr.bf16.mxu0 0
          %693 = vmatmul.mubr.bf16.gmra.mrb[0].mxu0 %v658
          %v694 = vpop.f32.mrb[0].mxu0
          %v695 = vadd.f32 %v643, %v694
          %v696 = vpop.f32.mrb[0].mxu0
          %v697 = vpop.f32.mrb[0].mxu0
          %v698 = vpop.f32.mrb[0].mxu0
          %699 = vdwg.mxu0
          %vm700 = vcmp.gt.f32.partialorder %v695, 0.0
          %v701 = vmul.f32 %v695, 1.442695
          %v702 = vpow.pop %v701
          %v703 = vsub.f32 %v702, 1.0
          %v704 = vmul.f32 %v703, 1.6732632
          %v705 = vsel %vm700, %v695, %v704
          %v706 = vmul.f32 %v705, 1.050701
          %v707 = vpack.c.bf16 %v706, %v706
          %vm708 = vcmask 257024
          %709 = vst.msk [vmem:[#allocation2] sm:$0xf] %vm708, %v707
        $region104: #{tpu_custom_call.1} parent=59 // pred_fallthru
          _
        %s710 = smul.u32 %s42, 8
        %v711 = vld [vmem:[#allocation2] sm:$0xf]
        %s712 = sshra.s32 %s710, 3
        %s713 = sand.u32 %s710, 7
        %s714 = smul.addr %s712, 4
        %s715 = scalar_lea.vmem [#allocation2], %s714
        %v716 = vld [vmem:[%s715] sm:$0xf]
        %v717 = vunpack.c.l.bf16 %v716
        %v718 = vmul.f32 %v717, 0.044194173
        %v719 = vpack.c.bf16 %v718, %v718
        %vm720 = vcmask 261120
        %v722 = vsel %vm720, %v719, 0
        %v725 = vsel %vm720, %v711, 0
        %727 = vmatprep.subr.bf16.mxu0 0
        %728 = vmatpush1.bf16.xpose.msra.mxu0 %v725
        %729 = vmatprep.subr.bf16.mxu0 0
        %730 = vmatpush1.bf16.xpose.msra.mxu0 0
        %731 = vmatprep.subr.bf16.mxu0 0
        %732 = vmatpush1.bf16.xpose.msra.mxu0 0
        %733 = vmatprep.subr.bf16.mxu0 0
        %734 = vmatpush1.bf16.xpose.msra.mxu0 0
        %735 = vmatprep.subr.bf16.mxu0 0
        %736 = vmatpush1.bf16.xpose.msra.mxu0 0
        %737 = vmatprep.subr.bf16.mxu0 0
        %738 = vmatpush1.bf16.xpose.msra.mxu0 0
        %739 = vmatprep.subr.bf16.mxu0 0
        %740 = vmatpush1.bf16.xpose.msra.mxu0 0
        %741 = vmatprep.subr.bf16.mxu0 0
        %742 = vmatpush1.bf16.xpose.msra.mxu0 0
        %743 = vmatprep.subr.bf16.mxu0 0
        %744 = vmatpush1.bf16.xpose.msra.mxu0 0
        %745 = vmatprep.subr.bf16.mxu0 0
        %746 = vmatpush1.bf16.xpose.msra.mxu0 0
        %747 = vmatprep.subr.bf16.mxu0 0
        %748 = vmatpush1.bf16.xpose.msra.mxu0 0
        %749 = vmatprep.subr.bf16.mxu0 0
        %750 = vmatpush1.bf16.xpose.msra.mxu0 0
        %751 = vmatprep.subr.bf16.mxu0 0
        %752 = vmatpush1.bf16.xpose.msra.mxu0 0
        %753 = vmatprep.subr.bf16.mxu0 0
        %754 = vmatpush1.bf16.xpose.msra.mxu0 0
        %755 = vmatprep.subr.bf16.mxu0 0
        %756 = vmatpush1.bf16.xpose.msra.mxu0 0
        %757 = vmatprep.subr.bf16.mxu0 0
        %758 = vmatpush1.bf16.xpose.msra.mxu0 0
        %759 = vmatprep.mubr.bf16.mxu0 0
        %760 = vmatmul.mubr.bf16.gmra.mrb[0].mxu0 %v722
        %v761 = vpop.f32.mrb[0].mxu0
        %v762 = vadd.f32 0.0, %v761
        %v763 = vpop.f32.mrb[0].mxu0
        %v764 = vpop.f32.mrb[0].mxu0
        %v765 = vpop.f32.mrb[0].mxu0
        %766 = vdwg.mxu0
        %vm767 = vcmask 64512
        %v768 = vsel %vm767, %v762, -inf
        %769 = vmax.xlane.f32.xlu0 %v768
        %v770 = vpop.xlane.xlu0 %769
        %v771 = vsub.f32 %v762, %v770
        %v772 = vmul.f32 %v771, 1.442695
        %v773 = vpow.pop %v772
        %v774 = vsel %vm767, %v773, 0.0
        %775 = vadd.xlane.f32.xlu0 %v774
        %v776 = vpop.xlane.xlu0 %775
        %v777 = vrcp.pop %v776
        %v778 = vmul.f32 %v773, %v777
        %v779 = vpack.c.bf16 %v778, %v778
        %v781 = vsel %vm767, %v779, 0
        %vm783 = vcmask 1043456
        %v784 = vsel %vm783, %v711, 0
        %786 = vmatprep.subr.bf16.mxu0 0
        %787 = vmatpush1.bf16.msra.mxu0 %v784
        %788 = vmatprep.subr.bf16.mxu0 0
        %789 = vmatpush1.bf16.msra.mxu0 0
        %790 = vmatprep.subr.bf16.mxu0 0
        %791 = vmatpush1.bf16.msra.mxu0 0
        %792 = vmatprep.subr.bf16.mxu0 0
        %793 = vmatpush1.bf16.msra.mxu0 0
        %794 = vmatprep.subr.bf16.mxu0 0
        %795 = vmatpush1.bf16.msra.mxu0 0
        %796 = vmatprep.subr.bf16.mxu0 0
        %797 = vmatpush1.bf16.msra.mxu0 0
        %798 = vmatprep.subr.bf16.mxu0 0
        %799 = vmatpush1.bf16.msra.mxu0 0
        %800 = vmatprep.subr.bf16.mxu0 0
        %801 = vmatpush1.bf16.msra.mxu0 0
        %802 = vmatprep.subr.bf16.mxu0 0
        %803 = vmatpush1.bf16.msra.mxu0 0
        %804 = vmatprep.subr.bf16.mxu0 0
        %805 = vmatpush1.bf16.msra.mxu0 0
        %806 = vmatprep.subr.bf16.mxu0 0
        %807 = vmatpush1.bf16.msra.mxu0 0
        %808 = vmatprep.subr.bf16.mxu0 0
        %809 = vmatpush1.bf16.msra.mxu0 0
        %810 = vmatprep.subr.bf16.mxu0 0
        %811 = vmatpush1.bf16.msra.mxu0 0
        %812 = vmatprep.subr.bf16.mxu0 0
        %813 = vmatpush1.bf16.msra.mxu0 0
        %814 = vmatprep.subr.bf16.mxu0 0
        %815 = vmatpush1.bf16.msra.mxu0 0
        %816 = vmatprep.subr.bf16.mxu0 0
        %817 = vmatpush1.bf16.msra.mxu0 0
        %818 = vmatprep.mubr.bf16.mxu0 0
        %819 = vmatmul.mubr.bf16.gmra.mrb[0].mxu0 %v781
        %v820 = vpop.f32.mrb[0].mxu0
        %v821 = vadd.f32 0.0, %v820
        %v822 = vpop.f32.mrb[0].mxu0
        %v823 = vpop.f32.mrb[0].mxu0
        %v824 = vpop.f32.mrb[0].mxu0
        %825 = vdwg.mxu0
        %v826 = vld [vmem:[#allocation12] sm:$0xf]
        %v827 = vld [vmem:[#allocation12 + $0x4] sm:$0xf]
        %v828 = vld [vmem:[#allocation12 + $0x8] sm:$0xf]
        %v829 = vld [vmem:[#allocation12 + $0xc] sm:$0xf]
        %v830 = vpack.c.bf16 %v821, %v821
        %v831 = vld [vmem:[#allocation14] sm:$0xf]
        %v832 = vld [vmem:[#allocation14 + $0x4] sm:$0xf]
        %v833 = vld [vmem:[#allocation14 + $0x8] sm:$0xf]
        %v834 = vld [vmem:[#allocation14 + $0xc] sm:$0xf]
        %v839 = vunpack.c.l.b16 %v831
        %v840 = vunpack.c.l.b16 %v832
        %v841 = vunpack.c.l.b16 %v833
        %v842 = vunpack.c.l.b16 %v834
        %v843 = vpack.c.b16 %v840, %v839
        %v844 = vpack.c.b16 %v842, %v841
        %v848 = vsel %vm720, %v830, 0
        %850 = vmatprep.subr.bf16.mxu0 0
        %851 = vmatpush1.bf16.msra.mxu0 %v843
        %852 = vmatprep.subr.bf16.mxu0 0
        %853 = vmatpush1.bf16.msra.mxu0 %v844
        %854 = vmatprep.subr.bf16.mxu0 0
        %855 = vmatpush1.bf16.msra.mxu0 0
        %856 = vmatprep.subr.bf16.mxu0 0
        %857 = vmatpush1.bf16.msra.mxu0 0
        %858 = vmatprep.subr.bf16.mxu0 0
        %859 = vmatpush1.bf16.msra.mxu0 0
        %860 = vmatprep.subr.bf16.mxu0 0
        %861 = vmatpush1.bf16.msra.mxu0 0
        %862 = vmatprep.subr.bf16.mxu0 0
        %863 = vmatpush1.bf16.msra.mxu0 0
        %864 = vmatprep.subr.bf16.mxu0 0
        %865 = vmatpush1.bf16.msra.mxu0 0
        %866 = vmatprep.subr.bf16.mxu0 0
        %867 = vmatpush1.bf16.msra.mxu0 0
        %868 = vmatprep.subr.bf16.mxu0 0
        %869 = vmatpush1.bf16.msra.mxu0 0
        %870 = vmatprep.subr.bf16.mxu0 0
        %871 = vmatpush1.bf16.msra.mxu0 0
        %872 = vmatprep.subr.bf16.mxu0 0
        %873 = vmatpush1.bf16.msra.mxu0 0
        %874 = vmatprep.subr.bf16.mxu0 0
        %875 = vmatpush1.bf16.msra.mxu0 0
        %876 = vmatprep.subr.bf16.mxu0 0
        %877 = vmatpush1.bf16.msra.mxu0 0
        %878 = vmatprep.subr.bf16.mxu0 0
        %879 = vmatpush1.bf16.msra.mxu0 0
        %880 = vmatprep.subr.bf16.mxu0 0
        %881 = vmatpush1.bf16.msra.mxu0 0
        %882 = vmatprep.mubr.bf16.mxu0 0
        %883 = vmatmul.mubr.bf16.gmra.mrb[0].mxu0 %v848
        %v884 = vpop.f32.mrb[0].mxu0
        %v885 = vadd.f32 0.0, %v884
        %v886 = vpop.f32.mrb[0].mxu0
        %v887 = vpop.f32.mrb[0].mxu0
        %v888 = vpop.f32.mrb[0].mxu0
        %889 = vdwg.mxu0
        %v894 = vunpack.c.l.b16 %v826
        %v895 = vunpack.c.l.b16 %v827
        %v896 = vunpack.c.l.b16 %v828
        %v897 = vunpack.c.l.b16 %v829
        %v898 = vpack.c.b16 %v895, %v894
        %v899 = vpack.c.b16 %v897, %v896
        %v903 = vsel %vm720, %v716, 0
        %905 = vmatprep.subr.bf16.mxu0 0
        %906 = vmatpush1.bf16.msra.mxu0 %v898
        %907 = vmatprep.subr.bf16.mxu0 0
        %908 = vmatpush1.bf16.msra.mxu0 %v899
        %909 = vmatprep.subr.bf16.mxu0 0
        %910 = vmatpush1.bf16.msra.mxu0 0
        %911 = vmatprep.subr.bf16.mxu0 0
        %912 = vmatpush1.bf16.msra.mxu0 0
        %913 = vmatprep.subr.bf16.mxu0 0
        %914 = vmatpush1.bf16.msra.mxu0 0
        %915 = vmatprep.subr.bf16.mxu0 0
        %916 = vmatpush1.bf16.msra.mxu0 0
        %917 = vmatprep.subr.bf16.mxu0 0
        %918 = vmatpush1.bf16.msra.mxu0 0
        %919 = vmatprep.subr.bf16.mxu0 0
        %920 = vmatpush1.bf16.msra.mxu0 0
        %921 = vmatprep.subr.bf16.mxu0 0
        %922 = vmatpush1.bf16.msra.mxu0 0
        %923 = vmatprep.subr.bf16.mxu0 0
        %924 = vmatpush1.bf16.msra.mxu0 0
        %925 = vmatprep.subr.bf16.mxu0 0
        %926 = vmatpush1.bf16.msra.mxu0 0
        %927 = vmatprep.subr.bf16.mxu0 0
        %928 = vmatpush1.bf16.msra.mxu0 0
        %929 = vmatprep.subr.bf16.mxu0 0
        %930 = vmatpush1.bf16.msra.mxu0 0
        %931 = vmatprep.subr.bf16.mxu0 0
        %932 = vmatpush1.bf16.msra.mxu0 0
        %933 = vmatprep.subr.bf16.mxu0 0
        %934 = vmatpush1.bf16.msra.mxu0 0
        %935 = vmatprep.subr.bf16.mxu0 0
        %936 = vmatpush1.bf16.msra.mxu0 0
        %937 = vmatprep.mubr.bf16.mxu0 0
        %938 = vmatmul.mubr.bf16.gmra.mrb[0].mxu0 %v903
        %v939 = vpop.f32.mrb[0].mxu0
        %v940 = vadd.f32 %v885, %v939
        %v941 = vpop.f32.mrb[0].mxu0
        %v942 = vpop.f32.mrb[0].mxu0
        %v943 = vpop.f32.mrb[0].mxu0
        %944 = vdwg.mxu0
        %v945 = vld [vmem:[#allocation15] sm:$0x1]
        %v947 = vlaneseq
        %v948 = vshrl.u32 %v947, 7
        %v949 = vsub.s32 0, %v948
        %v950 = vrot.slane %v945, %v949
        %v952 = vadd.f32 %v940, %v950
        %vm953 = vcmp.gt.f32.partialorder %v952, 0.0
        %v954 = vmul.f32 %v952, 1.442695
        %v955 = vpow.pop %v954
        %v956 = vsub.f32 %v955, 1.0
        %v957 = vmul.f32 %v956, 1.6732632
        %v958 = vsel %vm953, %v952, %v957
        %v959 = vmul.f32 %v958, 1.050701
        %v960 = vpack.c.bf16 %v959, %v959
        %v961 = vld [vmem:[#allocation17] sm:$0xf]
        %v962 = vld [vmem:[#allocation17 + $0x4] sm:$0xf]
        %v963 = vld [vmem:[#allocation17 + $0x8] sm:$0xf]
        %v964 = vld [vmem:[#allocation17 + $0xc] sm:$0xf]
        %v965 = vld [vmem:[#allocation18] sm:$0x1]
        %v967 = vlaneseq
        %v968 = vshrl.u32 %v967, 7
        %v969 = vsub.s32 0, %v968
        %v970 = vrot.slane %v965, %v969
        %v976 = vunpack.c.l.b16 %v961
        %v977 = vunpack.c.l.b16 %v962
        %v978 = vunpack.c.l.b16 %v963
        %v979 = vunpack.c.l.b16 %v964
        %v980 = vpack.c.b16 %v977, %v976
        %v981 = vpack.c.b16 %v979, %v978
        %v985 = vsel %vm720, %v960, 0
        %987 = vmatprep.subr.bf16.mxu0 0
        %988 = vmatpush1.bf16.msra.mxu0 %v980
        %989 = vmatprep.subr.bf16.mxu0 0
        %990 = vmatpush1.bf16.msra.mxu0 %v981
        %991 = vmatprep.subr.bf16.mxu0 0
        %992 = vmatpush1.bf16.msra.mxu0 0
        %993 = vmatprep.subr.bf16.mxu0 0
        %994 = vmatpush1.bf16.msra.mxu0 0
        %995 = vmatprep.subr.bf16.mxu0 0
        %996 = vmatpush1.bf16.msra.mxu0 0
        %997 = vmatprep.subr.bf16.mxu0 0
        %998 = vmatpush1.bf16.msra.mxu0 0
        %999 = vmatprep.subr.bf16.mxu0 0
        %1000 = vmatpush1.bf16.msra.mxu0 0
        %1001 = vmatprep.subr.bf16.mxu0 0
        %1002 = vmatpush1.bf16.msra.mxu0 0
        %1003 = vmatprep.subr.bf16.mxu0 0
        %1004 = vmatpush1.bf16.msra.mxu0 0
        %1005 = vmatprep.subr.bf16.mxu0 0
        %1006 = vmatpush1.bf16.msra.mxu0 0
        %1007 = vmatprep.subr.bf16.mxu0 0
        %1008 = vmatpush1.bf16.msra.mxu0 0
        %1009 = vmatprep.subr.bf16.mxu0 0
        %1010 = vmatpush1.bf16.msra.mxu0 0
        %1011 = vmatprep.subr.bf16.mxu0 0
        %1012 = vmatpush1.bf16.msra.mxu0 0
        %1013 = vmatprep.subr.bf16.mxu0 0
        %1014 = vmatpush1.bf16.msra.mxu0 0
        %1015 = vmatprep.subr.bf16.mxu0 0
        %1016 = vmatpush1.bf16.msra.mxu0 0
        %1017 = vmatprep.subr.bf16.mxu0 0
        %1018 = vmatpush1.bf16.msra.mxu0 0
        %1019 = vmatprep.mubr.bf16.mxu0 0
        %1020 = vmatmul.mubr.bf16.gmra.mrb[0].mxu0 %v985
        %v1021 = vpop.f32.mrb[0].mxu0
        %v1022 = vadd.f32 %v970, %v1021
        %v1023 = vpop.f32.mrb[0].mxu0
        %v1024 = vpop.f32.mrb[0].mxu0
        %v1025 = vpop.f32.mrb[0].mxu0
        %1026 = vdwg.mxu0
        %vm1027 = vcmp.gt.f32.partialorder %v1022, 0.0
        %v1028 = vmul.f32 %v1022, 1.442695
        %v1029 = vpow.pop %v1028
        %v1030 = vsub.f32 %v1029, 1.0
        %v1031 = vmul.f32 %v1030, 1.6732632
        %v1032 = vsel %vm1027, %v1022, %v1031
        %v1033 = vmul.f32 %v1032, 1.050701
        %s1034 = scalar_lea.vmem %s472, %s710 [#allocation3]
        %v1035 = vld [vmem:[%s1034] sm:$0xff]
        %v1036 = vadd.f32 %v1033, %v1035
        %1037 = vst.msk [vmem:[%s544] sm:$0xff] %vm720, %v1036
        %vm1038 = vcmask 60416
        %1039 = vst.msk [vmem:[%s551] sm:$0xf] %vm1038, %v779
        %s1040 = sand.u32 %s274, 1
        %s1041 = scalar_lea.sflag [#allocation5], %s1040
        %s1042 = sand.u32 %s274, 1
        %s1043 = smul.addr %s1042, 8
        %s1044 = scalar_lea.vmem [#allocation20], %s1043
        %s1045 = sand.u32 %s302, 1
        %s1046 = scalar_lea.sflag [#allocation22], %s1045
        %s1047 = sand.u32 %s302, 1
        %s1048 = smul.addr %s1047, 4
        %s1049 = scalar_lea.vmem [#allocation21], %s1048
        // Predicated region
        $region105: #{tpu_custom_call.1} parent=59 // pred_check
          %p1050 = pneg %p284
        $region106: #{tpu_custom_call.1} parent=59 // pred_check_branch
          %1052 = sbr.rel (%p1050) target = $region108
        $region107: #{tpu_custom_call.1} parent=59 // pred_region
          %s1054 = ssub.s32 128, 128
          %1055 = vsyncadd %s1041, %s1054
          %s1056 = sadd.s32 %s42, %s41
          %s1057 = smul.addr %s1056, 128
          %s1058 = scalar_lea.hbm %s10, %s1057
          %s1060 = sshll.u32 %s1044, 4
          %s1061 = int_to_ptr.vmem [resolvable:$true] %s1060
          %1063 = dma.vmem_to_hbm [thread:$0]  %s1061, 128, %s1058, %s1041
        $region108: #{tpu_custom_call.1} parent=59 // pred_fallthru
          _
        // Predicated region
        $region109: #{tpu_custom_call.1} parent=59 // pred_check
          %p1064 = pneg %p312
        $region110: #{tpu_custom_call.1} parent=59 // pred_check_branch
          %1066 = sbr.rel (%p1064) target = $region112
        $region111: #{tpu_custom_call.1} parent=59 // pred_region
          %s1068 = ssub.s32 64, 64
          %1069 = vsyncadd %s1046, %s1068
          %s1070 = sadd.s32 %s42, %s41
          %s1071 = smul.addr %s1070, 64
          %s1072 = scalar_lea.hbm %s11, %s1071
          %s1074 = sshll.u32 %s1049, 4
          %s1075 = int_to_ptr.vmem [resolvable:$true] %s1074
          %1077 = dma.vmem_to_hbm [thread:$0]  %s1075, 64, %s1072, %s1046
        $region112: #{tpu_custom_call.1} parent=59 // pred_fallthru
          _
      $region60: #{tpu_custom_call.1} parent=5 // pred_fallthru
        _
      %p1078 = scmp.le.s32.totalorder 2, %s32
      // Predicated region
      $region113: #{tpu_custom_call.1} parent=5 // pred_check
        %p1079 = pneg %p1078
      $region114: #{tpu_custom_call.1} parent=5 // pred_check_branch
        %1081 = sbr.rel (%p1079) target = $region116
      $region115: #{tpu_custom_call.1} parent=5 // pred_region
        %s1082 = ssub.s32 %s32, 2
        // Predicated region
        $region117: #{tpu_custom_call.1} parent=115 // pred_check
          %p1083 = pneg %p290
        $region118: #{tpu_custom_call.1} parent=115 // pred_check_branch
          %1085 = sbr.rel (%p1083) target = $region120
        $region119: #{tpu_custom_call.1} parent=115 // pred_region
          %s1086 = sand.u32 %s275, 1
          %s1087 = scalar_lea.sflag [#allocation5], %s1086
          %s1088 = sand.u32 %s275, 1
          %s1089 = smul.addr %s1088, 8
          %s1090 = scalar_lea.vmem [#allocation20], %s1089
          %1091 = dma.done %s1087, 128
        $region120: #{tpu_custom_call.1} parent=115 // pred_fallthru
          _
        // Predicated region
        $region121: #{tpu_custom_call.1} parent=115 // pred_check
          %p1092 = pneg %p318
        $region122: #{tpu_custom_call.1} parent=115 // pred_check_branch
          %1094 = sbr.rel (%p1092) target = $region124
        $region123: #{tpu_custom_call.1} parent=115 // pred_region
          %s1095 = sand.u32 %s303, 1
          %s1096 = scalar_lea.sflag [#allocation22], %s1095
          %s1097 = sand.u32 %s303, 1
          %s1098 = smul.addr %s1097, 4
          %s1099 = scalar_lea.vmem [#allocation21], %s1098
          %1100 = dma.done %s1096, 64
        $region124: #{tpu_custom_call.1} parent=115 // pred_fallthru
          _
      $region116: #{tpu_custom_call.1} parent=5 // pred_fallthru
        _
    $region6: #{tpu_custom_call.1} parent=1 // loop_footer
      %s36 = sadd.s32 1, %s32
    $region7: #{tpu_custom_call.1} parent=1 // loop_footer_branch
      %31 = sbr.rel target = $region3
    $region8: #{tpu_custom_call.1} parent=1 // loop_exit
      _
    %1101 = vsyncpa [#allocation4], 1
    %s1102 = scalar_lea.sflag [#allocation4], 1
    %1103 = vsyncpa %s1102, 1
    %1104 = vsyncpa [#allocation7], 1
    %1105 = vsyncpa [#allocation10], 1
    %1106 = vsyncpa [#allocation13], 1
    %1107 = vsyncpa [#allocation16], 1
    %1108 = vsyncpa [#allocation19], 1
    %1109 = vsyncpa [#allocation5], 1
    %s1110 = scalar_lea.sflag [#allocation5], 1
    %1111 = vsyncpa %s1110, 1
    %1112 = vsyncpa [#allocation22], 1
    %s1113 = scalar_lea.sflag [#allocation22], 1
    %1114 = vsyncpa %s1113, 1

</llo_original>
